<compile_context>
chip_gen: v7x
topology: tpu7x:2x2x1
jax: 0.10.0
libtpu: 0.0.40
codegen_flags: <defaults>
</compile_context>

<pallas_src>
import numpy as np
import jax
import jax.numpy as jnp
from jax import lax
from jax.experimental import pallas as pl
from jax.experimental.pallas import tpu as pltpu  # noqa: F401  (kept per template)

# ----- static configuration ---------------------------------------------------
EMBED = 32          # embed_size
HEADS = 4           # heads
SEQ_VK = 8          # seq_len_vk
SEQ_Q = 8           # seq_len_q (== head_dim for 'temporal')
N_BATCH = 2         # batch
INV_SQRT_E = 1.0 / (EMBED ** 0.5)

HE = HEADS * EMBED          # 128 : lane width of every fused operand
NE = N_BATCH * SEQ_Q        # 16  : sublane extent of the activations
HS = HEADS * SEQ_Q          # 32  : lane width of the rel-emb block (all heads)

# row offsets inside the packed parameter slab
_OFF_WV, _OFF_WK, _OFF_WQ, _OFF_WFC = 0, HE, 2 * HE, 3 * HE
_OFF_EHAT_LO, _OFF_EHAT_HI = 4 * HE, 5 * HE
_OFF_BIAS = 6 * HE
_SLAB_ROWS = 6 * HE + 8      # 776


# ----- fused kernel ------------------------------------------------------------
def _cross_attn_kernel(v_ref, k_ref, q_ref, p_ref, o_ref):
    f32 = jnp.float32

    # biases: one (8,128) sublane-aligned load; each row already tiled 4x lane-wise
    bias = p_ref[_OFF_BIAS:_OFF_BIAS + 8, :]
    bv, bk, bq, bfc = bias[0:1, :], bias[1:2, :], bias[2:3, :], bias[3:4, :]

    # fused per-head V/K/Q projections: one (16,128)@(128,128) matmul each
    # (block-diagonal, pre-transposed weights -> standard contraction; bias added once)
    v_proj = jnp.dot(v_ref[...], p_ref[_OFF_WV:_OFF_WV + HE, :],
                     preferred_element_type=f32) + bv
    k_proj = jnp.dot(k_ref[...], p_ref[_OFF_WK:_OFF_WK + HE, :],
                     preferred_element_type=f32) + bk
    q_proj = jnp.dot(q_ref[...], p_ref[_OFF_WQ:_OFF_WQ + HE, :],
                     preferred_element_type=f32) + bq

    # hoisted masks (cmp/select only -- no div/rem inside the kernel)
    r16 = lax.broadcasted_iota(jnp.int32, (NE, NE), 0)
    c16 = lax.broadcasted_iota(jnp.int32, (NE, NE), 1)
    rb = r16 >= SEQ_Q
    cb = c16 >= SEQ_VK
    same_batch = jnp.logical_not(jnp.logical_xor(rb, cb))
    r_in = jnp.where(rb, r16 - SEQ_Q, r16)      # query position within its batch
    c_in = jnp.where(cb, c16 - SEQ_VK, c16)     # key position within its batch
    # reference keeps strictly-upper (key > query) entries; rest -> -1e20 (as in torch).
    keep = jnp.logical_and(same_batch, c_in > r_in)
    # cross-batch entries get -1e30 so exp() underflows to exactly 0 and the fully
    # masked last query row still normalizes over 8 (not 16) positions.
    fill = jnp.where(same_batch, f32(-1e20), f32(-1e30))

    # relative-embedding term: _mask_positions + _skew folded into pre-skewed E.
    #   S[r, h*8+c] = sum_d v_proj[r, h*32+d] * E[h, c+7-(r%8), d]  for c <= r%8, else 0
    # The per-shift matrices Ehat_a are packed 4-per-(128,128) block in the wrapper,
    # so the whole skew is 2 lane-dense matmuls + an 8-way row select.
    p_lo = jnp.dot(v_proj, p_ref[_OFF_EHAT_LO:_OFF_EHAT_LO + HE, :],
                   preferred_element_type=f32)            # (16,128) = [P_0|P_1|P_2|P_3]
    p_hi = jnp.dot(v_proj, p_ref[_OFF_EHAT_HI:_OFF_EHAT_HI + HE, :],
                   preferred_element_type=f32)            # (16,128) = [P_4|P_5|P_6|P_7]
    r32 = lax.broadcasted_iota(jnp.int32, (NE, HS), 0)
    rmod = jnp.where(r32 >= SEQ_Q, r32 - SEQ_Q, r32)      # row position within its batch
    s_all = jnp.zeros((NE, HS), f32)
    for a in range(SEQ_Q):                                # static, fully unrolled
        src = p_lo if a < 4 else p_hi
        blk = src[:, (a % 4) * HS:(a % 4 + 1) * HS]       # (16,32), aligned lane slice
        s_all = s_all + jnp.where(rmod == a, blk, 0.0)

    inv_sqrt_e = f32(INV_SQRT_E)
    head_out = []
    for h in range(HEADS):                                # static, fully unrolled
        cs = slice(h * EMBED, (h + 1) * EMBED)
        qh, kh, vh = q_proj[:, cs], k_proj[:, cs], v_proj[:, cs]     # (16,32) each
        # scores for BOTH batches of this head in one MXU op; cross-batch blocks are
        # killed by `fill`, so softmax and attn @ V stay exact per batch.
        scores = lax.dot_general(qh, kh, (((1,), (1,)), ((), ())),
                                 preferred_element_type=f32)         # (16,16)
        logits = jnp.where(keep, scores, fill) * inv_sqrt_e
        m = jnp.max(logits, axis=-1, keepdims=True)
        p = jnp.exp(logits - m)
        attn = p * pl.reciprocal(jnp.sum(p, axis=-1, keepdims=True), approx=True)
        s_h = s_all[:, h * SEQ_Q:(h + 1) * SEQ_Q]                    # (16,8)
        attn = attn + jnp.where(same_batch,
                                jnp.concatenate([s_h, s_h], axis=1), 0.0)
        head_out.append(jnp.dot(attn, vh, preferred_element_type=f32))   # (16,32)

    # fc_out fused as one block-diagonal (128,128) matmul; the result is already the
    # lane-dense (16,128) output slab -> a single unmasked store.
    z = jnp.concatenate(head_out, axis=1)                            # (16,128)
    o_ref[...] = jnp.dot(z, p_ref[_OFF_WFC:_OFF_WFC + HE, :],
                         preferred_element_type=f32) + bfc


# ----- one-time parameter packing ----------------------------------------------
def pack_params(p):
    """Pack all CrossAttention params into a single (776,128) f32 slab:
       [Wv_blk; Wk_blk; Wq_blk; Wfc_blk; Ehat_lo; Ehat_hi; biases]."""
    f32 = jnp.float32

    def blkdiag(w):      # (E,E) torch-style Linear weight -> block-diag of w.T
        wt = jnp.asarray(w, f32).T
        out = jnp.zeros((HE, HE), f32)
        for h in range(HEADS):
            out = out.at[h * EMBED:(h + 1) * EMBED, h * EMBED:(h + 1) * EMBED].set(wt)
        return out

    # Pre-skewed relative embedding: for shift a (= within-batch row position),
    #   Ehat_a[h*EMBED+d, h*SEQ_Q+c] = E[h, c+SEQ_Q-1-a, d]  if c <= a else 0
    E = jnp.asarray(p['E'], f32)                          # (HEADS, SEQ_Q, EMBED)
    ehat = []
    for a in range(SEQ_Q):
        blk = jnp.zeros((HE, HS), f32)
        for h in range(HEADS):
            cols = [E[h, c + SEQ_Q - 1 - a, :] if c <= a else jnp.zeros((EMBED,), f32)
                    for c in range(SEQ_Q)]
            m = jnp.stack(cols, axis=1)                   # (EMBED, SEQ_Q)
            blk = blk.at[h * EMBED:(h + 1) * EMBED, h * SEQ_Q:(h + 1) * SEQ_Q].set(m)
        ehat.append(blk)                                  # (128, 32)
    ehat_lo = jnp.concatenate(ehat[:4], axis=1)           # (128,128): shifts 0..3
    ehat_hi = jnp.concatenate(ehat[4:], axis=1)           # (128,128): shifts 4..7

    def tile_bias(b):                                     # (1,E) -> (1,128), per-head tiled
        return jnp.tile(jnp.asarray(b, f32).reshape(1, EMBED), (1, HEADS))

    bias = jnp.concatenate([tile_bias(p['bv']), tile_bias(p['bk']),
                            tile_bias(p['bq']), tile_bias(p['bfc']),
                            jnp.zeros((4, HE), f32)], axis=0)        # (8,128)

    slab = jnp.concatenate([blkdiag(p['wv']), blkdiag(p['wk']), blkdiag(p['wq']),
                            blkdiag(p['wfc']), ehat_lo, ehat_hi, bias], axis=0)
    assert slab.shape == (_SLAB_ROWS, HE)
    return slab


# ----- wrapper ------------------------------------------------------------------
def cross_attention(v, k, q, packed):
    """v,k: (N, SEQ_VK*HEADS, EMBED); q: (N, SEQ_Q*HEADS, EMBED) -> same layout out."""
    N = v.shape[0]
    # free, layout-preserving reshapes: (N, seq*heads, E) <-> (N*seq, heads*E)
    v2 = v.reshape(N * SEQ_VK, HE)
    k2 = k.reshape(N * SEQ_VK, HE)
    q2 = q.reshape(N * SEQ_Q, HE)
    out2 = pl.pallas_call(
        _cross_attn_kernel,
        out_shape=jax.ShapeDtypeStruct((N * SEQ_Q, HE), jnp.float32),
    )(v2, k2, q2, packed)
    return out2.reshape(N, SEQ_Q * HEADS, EMBED)


# ----- pure-JAX reference (mirrors the PyTorch forward exactly) ------------------
def ref_forward(v, k, q, p):
    N = v.shape[0]
    values = v @ p['wv'].T + p['bv']
    keys = k @ p['wk'].T + p['bk']
    queries = q @ p['wq'].T + p['bq']
    values = values.reshape(N, SEQ_VK, HEADS, EMBED)
    keys = keys.reshape(N, SEQ_VK, HEADS, EMBED)
    queries = queries.reshape(N, SEQ_Q, HEADS, EMBED)

    QE = jnp.einsum('nihd,hjd->nhij', values, p['E'])
    i = jnp.arange(SEQ_VK)[:, None]
    j = jnp.arange(SEQ_Q)[None, :]
    QEm = jnp.where((i + j) >= (SEQ_Q - 1), QE, 0.0)
    padded = jnp.pad(QEm, ((0, 0), (0, 0), (0, 0), (1, 0)))
    S = padded.reshape(N, HEADS, SEQ_Q + 1, SEQ_VK)[:, :, 1:, :]

    qk = jnp.einsum('nqhd,nkhd->nhqk', queries, keys)
    qi = jnp.arange(SEQ_Q)[:, None]
    kj = jnp.arange(SEQ_VK)[None, :]
    qk = jnp.where(kj > qi, qk, -1e20)
    attention = jax.nn.softmax(qk / (EMBED ** 0.5), axis=3) + S
    z = jnp.einsum('nhql,nlhd->nqhd', attention, values).reshape(N, SEQ_Q * HEADS, EMBED)
    return z @ p['wfc'].T + p['bfc']


if __name__ == "__main__":
    f32 = jnp.float32
    key = jax.random.PRNGKey(0)
    ks = jax.random.split(key, 16)

    def nrm(rk, shape, scale=0.05):
        return (scale * jax.random.normal(rk, shape)).astype(f32)

    params = {
        # CrossAttention (module='temporal'): Linear(E,E) x3, E param (H, seq_q, E), fc_out
        'wv': nrm(ks[0], (EMBED, EMBED)), 'bv': nrm(ks[1], (1, EMBED)),
        'wk': nrm(ks[2], (EMBED, EMBED)), 'bk': nrm(ks[3], (1, EMBED)),
        'wq': nrm(ks[4], (EMBED, EMBED)), 'bq': nrm(ks[5], (1, EMBED)),
        'E': jax.random.normal(ks[6], (HEADS, SEQ_Q, EMBED)).astype(f32),
        'wfc': nrm(ks[7], (EMBED, EMBED)), 'bfc': nrm(ks[8], (1, EMBED)),
    }

    v_in = jax.random.normal(ks[9], (N_BATCH, SEQ_VK * HEADS, EMBED)).astype(f32)
    k_in = jax.random.normal(ks[10], (N_BATCH, SEQ_VK * HEADS, EMBED)).astype(f32)
    q_in = jax.random.normal(ks[11], (N_BATCH, SEQ_Q * HEADS, EMBED)).astype(f32)

    packed = jax.block_until_ready(pack_params(params))   # one-time packing, off the hot path

    out = jax.jit(cross_attention)(v_in, k_in, q_in, packed)
    out = jax.block_until_ready(out)

    ref = ref_forward(v_in, k_in, q_in, params)
    np.testing.assert_allclose(np.asarray(out), np.asarray(ref), atol=2e-2, rtol=2e-2)

    print("KERNEL_OK")
</pallas_src>

<mosaic_0001>
module attributes {stable_mosaic.version = 11 : i64} {
  func.func @_cross_attn_kernel(%arg0: memref<16x128xf32, #tpu.memory_space<vmem>>, %arg1: memref<16x128xf32, #tpu.memory_space<vmem>>, %arg2: memref<16x128xf32, #tpu.memory_space<vmem>>, %arg3: memref<776x128xf32, #tpu.memory_space<vmem>>, %arg4: memref<16x128xf32, #tpu.memory_space<vmem>>) attributes {dimension_semantics = [], scalar_prefetch = 0 : i64, scratch_operands = 0 : i64, tpu.core_type = #tpu.core_type<tc>} {
    %c768 = arith.constant 768 : index
    %c0 = arith.constant 0 : index
    %0 = vector.load %arg3[%c768, %c0] : memref<776x128xf32, #tpu.memory_space<vmem>>, vector<8x128xf32>
    %1 = vector.extract_strided_slice %0 {offsets = [0, 0], sizes = [1, 128], strides = [1, 1]} : vector<8x128xf32> to vector<1x128xf32>
    %2 = vector.extract_strided_slice %0 {offsets = [1, 0], sizes = [1, 128], strides = [1, 1]} : vector<8x128xf32> to vector<1x128xf32>
    %3 = vector.extract_strided_slice %0 {offsets = [2, 0], sizes = [1, 128], strides = [1, 1]} : vector<8x128xf32> to vector<1x128xf32>
    %4 = vector.extract_strided_slice %0 {offsets = [3, 0], sizes = [1, 128], strides = [1, 1]} : vector<8x128xf32> to vector<1x128xf32>
    %c0_0 = arith.constant 0 : index
    %c0_1 = arith.constant 0 : index
    %5 = vector.load %arg0[%c0_0, %c0_1] : memref<16x128xf32, #tpu.memory_space<vmem>>, vector<16x128xf32>
    %c0_2 = arith.constant 0 : index
    %c0_3 = arith.constant 0 : index
    %6 = vector.load %arg3[%c0_2, %c0_3] : memref<776x128xf32, #tpu.memory_space<vmem>>, vector<128x128xf32>
    %cst = arith.constant dense<0.000000e+00> : vector<16x128xf32>
    %7 = tpu.matmul %5, %6, %cst {dimension_numbers = #tpu.dot_dimension_numbers<[1], [0], [0], [1], [0, 0, 1, 1], [], []>} : vector<16x128xf32>, vector<128x128xf32>, vector<16x128xf32> -> vector<16x128xf32>
    %8 = vector.broadcast %1 : vector<1x128xf32> to vector<16x128xf32>
    %9 = arith.addf %7, %8 : vector<16x128xf32>
    %c0_4 = arith.constant 0 : index
    %c0_5 = arith.constant 0 : index
    %10 = vector.load %arg1[%c0_4, %c0_5] : memref<16x128xf32, #tpu.memory_space<vmem>>, vector<16x128xf32>
    %c128 = arith.constant 128 : index
    %c0_6 = arith.constant 0 : index
    %11 = vector.load %arg3[%c128, %c0_6] : memref<776x128xf32, #tpu.memory_space<vmem>>, vector<128x128xf32>
    %cst_7 = arith.constant dense<0.000000e+00> : vector<16x128xf32>
    %12 = tpu.matmul %10, %11, %cst_7 {dimension_numbers = #tpu.dot_dimension_numbers<[1], [0], [0], [1], [0, 0, 1, 1], [], []>} : vector<16x128xf32>, vector<128x128xf32>, vector<16x128xf32> -> vector<16x128xf32>
    %13 = vector.broadcast %2 : vector<1x128xf32> to vector<16x128xf32>
    %14 = arith.addf %12, %13 : vector<16x128xf32>
    %c0_8 = arith.constant 0 : index
    %c0_9 = arith.constant 0 : index
    %15 = vector.load %arg2[%c0_8, %c0_9] : memref<16x128xf32, #tpu.memory_space<vmem>>, vector<16x128xf32>
    %c256 = arith.constant 256 : index
    %c0_10 = arith.constant 0 : index
    %16 = vector.load %arg3[%c256, %c0_10] : memref<776x128xf32, #tpu.memory_space<vmem>>, vector<128x128xf32>
    %cst_11 = arith.constant dense<0.000000e+00> : vector<16x128xf32>
    %17 = tpu.matmul %15, %16, %cst_11 {dimension_numbers = #tpu.dot_dimension_numbers<[1], [0], [0], [1], [0, 0, 1, 1], [], []>} : vector<16x128xf32>, vector<128x128xf32>, vector<16x128xf32> -> vector<16x128xf32>
    %18 = vector.broadcast %3 : vector<1x128xf32> to vector<16x128xf32>
    %19 = arith.addf %17, %18 : vector<16x128xf32>
    %20 = tpu.iota {dimensions = array<i32: 0>} : vector<16x16xi32>
    %21 = tpu.iota {dimensions = array<i32: 1>} : vector<16x16xi32>
    %c8_i32 = arith.constant 8 : i32
    %22 = vector.broadcast %c8_i32 : i32 to vector<16x16xi32>
    %23 = arith.cmpi sge, %20, %22 : vector<16x16xi32>
    %c8_i32_12 = arith.constant 8 : i32
    %24 = vector.broadcast %c8_i32_12 : i32 to vector<16x16xi32>
    %25 = arith.cmpi sge, %21, %24 : vector<16x16xi32>
    %26 = arith.xori %23, %25 : vector<16x16xi1>
    %cst_13 = arith.constant dense<true> : vector<16x16xi1>
    %27 = arith.xori %26, %cst_13 : vector<16x16xi1>
    %c8_i32_14 = arith.constant 8 : i32
    %28 = vector.broadcast %c8_i32_14 : i32 to vector<16x16xi32>
    %29 = arith.subi %20, %28 : vector<16x16xi32>
    %30 = arith.select %23, %29, %20 : vector<16x16xi1>, vector<16x16xi32>
    %c8_i32_15 = arith.constant 8 : i32
    %31 = vector.broadcast %c8_i32_15 : i32 to vector<16x16xi32>
    %32 = arith.subi %21, %31 : vector<16x16xi32>
    %33 = arith.select %25, %32, %21 : vector<16x16xi1>, vector<16x16xi32>
    %34 = arith.cmpi sgt, %33, %30 : vector<16x16xi32>
    %35 = arith.andi %27, %34 : vector<16x16xi1>
    %cst_16 = arith.constant -1.000000e+20 : f32
    %cst_17 = arith.constant -1.000000e+30 : f32
    %36 = vector.broadcast %cst_16 : f32 to vector<16x16xf32>
    %37 = vector.broadcast %cst_17 : f32 to vector<16x16xf32>
    %38 = arith.select %27, %36, %37 : vector<16x16xi1>, vector<16x16xf32>
    %c512 = arith.constant 512 : index
    %c0_18 = arith.constant 0 : index
    %39 = vector.load %arg3[%c512, %c0_18] : memref<776x128xf32, #tpu.memory_space<vmem>>, vector<128x128xf32>
    %cst_19 = arith.constant dense<0.000000e+00> : vector<16x128xf32>
    %40 = tpu.matmul %9, %39, %cst_19 {dimension_numbers = #tpu.dot_dimension_numbers<[1], [0], [0], [1], [0, 0, 1, 1], [], []>} : vector<16x128xf32>, vector<128x128xf32>, vector<16x128xf32> -> vector<16x128xf32>
    %c640 = arith.constant 640 : index
    %c0_20 = arith.constant 0 : index
    %41 = vector.load %arg3[%c640, %c0_20] : memref<776x128xf32, #tpu.memory_space<vmem>>, vector<128x128xf32>
    %cst_21 = arith.constant dense<0.000000e+00> : vector<16x128xf32>
    %42 = tpu.matmul %9, %41, %cst_21 {dimension_numbers = #tpu.dot_dimension_numbers<[1], [0], [0], [1], [0, 0, 1, 1], [], []>} : vector<16x128xf32>, vector<128x128xf32>, vector<16x128xf32> -> vector<16x128xf32>
    %43 = tpu.iota {dimensions = array<i32: 0>} : vector<16x32xi32>
    %c8_i32_22 = arith.constant 8 : i32
    %44 = vector.broadcast %c8_i32_22 : i32 to vector<16x32xi32>
    %45 = arith.cmpi sge, %43, %44 : vector<16x32xi32>
    %c8_i32_23 = arith.constant 8 : i32
    %46 = vector.broadcast %c8_i32_23 : i32 to vector<16x32xi32>
    %47 = arith.subi %43, %46 : vector<16x32xi32>
    %48 = arith.select %45, %47, %43 : vector<16x32xi1>, vector<16x32xi32>
    %cst_24 = arith.constant 0.000000e+00 : f32
    %49 = vector.broadcast %cst_24 : f32 to vector<16x32xf32>
    %50 = vector.extract_strided_slice %40 {offsets = [0, 0], sizes = [16, 32], strides = [1, 1]} : vector<16x128xf32> to vector<16x32xf32>
    %c0_i32 = arith.constant 0 : i32
    %51 = vector.broadcast %c0_i32 : i32 to vector<16x32xi32>
    %52 = arith.cmpi eq, %48, %51 : vector<16x32xi32>
    %cst_25 = arith.constant 0.000000e+00 : f32
    %53 = vector.broadcast %cst_25 : f32 to vector<16x32xf32>
    %54 = arith.select %52, %50, %53 : vector<16x32xi1>, vector<16x32xf32>
    %55 = arith.addf %49, %54 : vector<16x32xf32>
    %56 = vector.extract_strided_slice %40 {offsets = [0, 32], sizes = [16, 32], strides = [1, 1]} : vector<16x128xf32> to vector<16x32xf32>
    %c1_i32 = arith.constant 1 : i32
    %57 = vector.broadcast %c1_i32 : i32 to vector<16x32xi32>
    %58 = arith.cmpi eq, %48, %57 : vector<16x32xi32>
    %cst_26 = arith.constant 0.000000e+00 : f32
    %59 = vector.broadcast %cst_26 : f32 to vector<16x32xf32>
    %60 = arith.select %58, %56, %59 : vector<16x32xi1>, vector<16x32xf32>
    %61 = arith.addf %55, %60 : vector<16x32xf32>
    %62 = vector.extract_strided_slice %40 {offsets = [0, 64], sizes = [16, 32], strides = [1, 1]} : vector<16x128xf32> to vector<16x32xf32>
    %c2_i32 = arith.constant 2 : i32
    %63 = vector.broadcast %c2_i32 : i32 to vector<16x32xi32>
    %64 = arith.cmpi eq, %48, %63 : vector<16x32xi32>
    %cst_27 = arith.constant 0.000000e+00 : f32
    %65 = vector.broadcast %cst_27 : f32 to vector<16x32xf32>
    %66 = arith.select %64, %62, %65 : vector<16x32xi1>, vector<16x32xf32>
    %67 = arith.addf %61, %66 : vector<16x32xf32>
    %68 = vector.extract_strided_slice %40 {offsets = [0, 96], sizes = [16, 32], strides = [1, 1]} : vector<16x128xf32> to vector<16x32xf32>
    %c3_i32 = arith.constant 3 : i32
    %69 = vector.broadcast %c3_i32 : i32 to vector<16x32xi32>
    %70 = arith.cmpi eq, %48, %69 : vector<16x32xi32>
    %cst_28 = arith.constant 0.000000e+00 : f32
    %71 = vector.broadcast %cst_28 : f32 to vector<16x32xf32>
    %72 = arith.select %70, %68, %71 : vector<16x32xi1>, vector<16x32xf32>
    %73 = arith.addf %67, %72 : vector<16x32xf32>
    %74 = vector.extract_strided_slice %42 {offsets = [0, 0], sizes = [16, 32], strides = [1, 1]} : vector<16x128xf32> to vector<16x32xf32>
    %c4_i32 = arith.constant 4 : i32
    %75 = vector.broadcast %c4_i32 : i32 to vector<16x32xi32>
    %76 = arith.cmpi eq, %48, %75 : vector<16x32xi32>
    %cst_29 = arith.constant 0.000000e+00 : f32
    %77 = vector.broadcast %cst_29 : f32 to vector<16x32xf32>
    %78 = arith.select %76, %74, %77 : vector<16x32xi1>, vector<16x32xf32>
    %79 = arith.addf %73, %78 : vector<16x32xf32>
    %80 = vector.extract_strided_slice %42 {offsets = [0, 32], sizes = [16, 32], strides = [1, 1]} : vector<16x128xf32> to vector<16x32xf32>
    %c5_i32 = arith.constant 5 : i32
    %81 = vector.broadcast %c5_i32 : i32 to vector<16x32xi32>
    %82 = arith.cmpi eq, %48, %81 : vector<16x32xi32>
    %cst_30 = arith.constant 0.000000e+00 : f32
    %83 = vector.broadcast %cst_30 : f32 to vector<16x32xf32>
    %84 = arith.select %82, %80, %83 : vector<16x32xi1>, vector<16x32xf32>
    %85 = arith.addf %79, %84 : vector<16x32xf32>
    %86 = vector.extract_strided_slice %42 {offsets = [0, 64], sizes = [16, 32], strides = [1, 1]} : vector<16x128xf32> to vector<16x32xf32>
    %c6_i32 = arith.constant 6 : i32
    %87 = vector.broadcast %c6_i32 : i32 to vector<16x32xi32>
    %88 = arith.cmpi eq, %48, %87 : vector<16x32xi32>
    %cst_31 = arith.constant 0.000000e+00 : f32
    %89 = vector.broadcast %cst_31 : f32 to vector<16x32xf32>
    %90 = arith.select %88, %86, %89 : vector<16x32xi1>, vector<16x32xf32>
    %91 = arith.addf %85, %90 : vector<16x32xf32>
    %92 = vector.extract_strided_slice %42 {offsets = [0, 96], sizes = [16, 32], strides = [1, 1]} : vector<16x128xf32> to vector<16x32xf32>
    %c7_i32 = arith.constant 7 : i32
    %93 = vector.broadcast %c7_i32 : i32 to vector<16x32xi32>
    %94 = arith.cmpi eq, %48, %93 : vector<16x32xi32>
    %cst_32 = arith.constant 0.000000e+00 : f32
    %95 = vector.broadcast %cst_32 : f32 to vector<16x32xf32>
    %96 = arith.select %94, %92, %95 : vector<16x32xi1>, vector<16x32xf32>
    %97 = arith.addf %91, %96 : vector<16x32xf32>
    %98 = vector.extract_strided_slice %19 {offsets = [0, 0], sizes = [16, 32], strides = [1, 1]} : vector<16x128xf32> to vector<16x32xf32>
    %99 = vector.extract_strided_slice %14 {offsets = [0, 0], sizes = [16, 32], strides = [1, 1]} : vector<16x128xf32> to vector<16x32xf32>
    %100 = vector.extract_strided_slice %9 {offsets = [0, 0], sizes = [16, 32], strides = [1, 1]} : vector<16x128xf32> to vector<16x32xf32>
    %cst_33 = arith.constant dense<0.000000e+00> : vector<16x16xf32>
    %101 = tpu.matmul %98, %99, %cst_33 {dimension_numbers = #tpu.dot_dimension_numbers<[1], [1], [0], [0], [0, 0, 1, 0], [], []>} : vector<16x32xf32>, vector<16x32xf32>, vector<16x16xf32> -> vector<16x16xf32>
    %102 = arith.select %35, %101, %38 : vector<16x16xi1>, vector<16x16xf32>
    %cst_34 = arith.constant 0.176776692 : f32
    %103 = vector.broadcast %cst_34 : f32 to vector<16x16xf32>
    %104 = arith.mulf %102, %103 : vector<16x16xf32>
    %cst_35 = arith.constant dense<0xFF800000> : vector<16xf32>
    %105 = vector.multi_reduction <maximumf>, %104, %cst_35 [1] : vector<16x16xf32> to vector<16xf32>
    %106 = vector.shape_cast %105 : vector<16xf32> to vector<16x1xf32>
    %107 = vector.broadcast %106 : vector<16x1xf32> to vector<16x16xf32>
    %108 = arith.subf %104, %107 : vector<16x16xf32>
    %109 = math.exp %108 : vector<16x16xf32>
    %cst_36 = arith.constant dense<0.000000e+00> : vector<16xf32>
    %110 = vector.multi_reduction <add>, %109, %cst_36 [1] : vector<16x16xf32> to vector<16xf32>
    %111 = vector.shape_cast %110 : vector<16xf32> to vector<16x1xf32>
    %112 = tpu.reciprocal %111 {approx = true} : vector<16x1xf32> -> vector<16x1xf32>
    %113 = vector.broadcast %112 : vector<16x1xf32> to vector<16x16xf32>
    %114 = arith.mulf %109, %113 : vector<16x16xf32>
    %115 = vector.extract_strided_slice %97 {offsets = [0, 0], sizes = [16, 8], strides = [1, 1]} : vector<16x32xf32> to vector<16x8xf32>
    %116 = tpu.concatenate %115, %115 in 1 : vector<16x8xf32>, vector<16x8xf32> -> vector<16x16xf32>
    %cst_37 = arith.constant 0.000000e+00 : f32
    %117 = vector.broadcast %cst_37 : f32 to vector<16x16xf32>
    %118 = arith.select %27, %116, %117 : vector<16x16xi1>, vector<16x16xf32>
    %119 = arith.addf %114, %118 : vector<16x16xf32>
    %cst_38 = arith.constant dense<0.000000e+00> : vector<16x32xf32>
    %120 = tpu.matmul %119, %100, %cst_38 {dimension_numbers = #tpu.dot_dimension_numbers<[1], [0], [0], [1], [0, 0, 1, 1], [], []>} : vector<16x16xf32>, vector<16x32xf32>, vector<16x32xf32> -> vector<16x32xf32>
    %121 = vector.extract_strided_slice %19 {offsets = [0, 32], sizes = [16, 32], strides = [1, 1]} : vector<16x128xf32> to vector<16x32xf32>
    %122 = vector.extract_strided_slice %14 {offsets = [0, 32], sizes = [16, 32], strides = [1, 1]} : vector<16x128xf32> to vector<16x32xf32>
    %123 = vector.extract_strided_slice %9 {offsets = [0, 32], sizes = [16, 32], strides = [1, 1]} : vector<16x128xf32> to vector<16x32xf32>
    %cst_39 = arith.constant dense<0.000000e+00> : vector<16x16xf32>
    %124 = tpu.matmul %121, %122, %cst_39 {dimension_numbers = #tpu.dot_dimension_numbers<[1], [1], [0], [0], [0, 0, 1, 0], [], []>} : vector<16x32xf32>, vector<16x32xf32>, vector<16x16xf32> -> vector<16x16xf32>
    %125 = arith.select %35, %124, %38 : vector<16x16xi1>, vector<16x16xf32>
    %cst_40 = arith.constant 0.176776692 : f32
    %126 = vector.broadcast %cst_40 : f32 to vector<16x16xf32>
    %127 = arith.mulf %125, %126 : vector<16x16xf32>
    %cst_41 = arith.constant dense<0xFF800000> : vector<16xf32>
    %128 = vector.multi_reduction <maximumf>, %127, %cst_41 [1] : vector<16x16xf32> to vector<16xf32>
    %129 = vector.shape_cast %128 : vector<16xf32> to vector<16x1xf32>
    %130 = vector.broadcast %129 : vector<16x1xf32> to vector<16x16xf32>
    %131 = arith.subf %127, %130 : vector<16x16xf32>
    %132 = math.exp %131 : vector<16x16xf32>
    %cst_42 = arith.constant dense<0.000000e+00> : vector<16xf32>
    %133 = vector.multi_reduction <add>, %132, %cst_42 [1] : vector<16x16xf32> to vector<16xf32>
    %134 = vector.shape_cast %133 : vector<16xf32> to vector<16x1xf32>
    %135 = tpu.reciprocal %134 {approx = true} : vector<16x1xf32> -> vector<16x1xf32>
    %136 = vector.broadcast %135 : vector<16x1xf32> to vector<16x16xf32>
    %137 = arith.mulf %132, %136 : vector<16x16xf32>
    %138 = vector.extract_strided_slice %97 {offsets = [0, 8], sizes = [16, 8], strides = [1, 1]} : vector<16x32xf32> to vector<16x8xf32>
    %139 = tpu.concatenate %138, %138 in 1 : vector<16x8xf32>, vector<16x8xf32> -> vector<16x16xf32>
    %cst_43 = arith.constant 0.000000e+00 : f32
    %140 = vector.broadcast %cst_43 : f32 to vector<16x16xf32>
    %141 = arith.select %27, %139, %140 : vector<16x16xi1>, vector<16x16xf32>
    %142 = arith.addf %137, %141 : vector<16x16xf32>
    %cst_44 = arith.constant dense<0.000000e+00> : vector<16x32xf32>
    %143 = tpu.matmul %142, %123, %cst_44 {dimension_numbers = #tpu.dot_dimension_numbers<[1], [0], [0], [1], [0, 0, 1, 1], [], []>} : vector<16x16xf32>, vector<16x32xf32>, vector<16x32xf32> -> vector<16x32xf32>
    %144 = vector.extract_strided_slice %19 {offsets = [0, 64], sizes = [16, 32], strides = [1, 1]} : vector<16x128xf32> to vector<16x32xf32>
    %145 = vector.extract_strided_slice %14 {offsets = [0, 64], sizes = [16, 32], strides = [1, 1]} : vector<16x128xf32> to vector<16x32xf32>
    %146 = vector.extract_strided_slice %9 {offsets = [0, 64], sizes = [16, 32], strides = [1, 1]} : vector<16x128xf32> to vector<16x32xf32>
    %cst_45 = arith.constant dense<0.000000e+00> : vector<16x16xf32>
    %147 = tpu.matmul %144, %145, %cst_45 {dimension_numbers = #tpu.dot_dimension_numbers<[1], [1], [0], [0], [0, 0, 1, 0], [], []>} : vector<16x32xf32>, vector<16x32xf32>, vector<16x16xf32> -> vector<16x16xf32>
    %148 = arith.select %35, %147, %38 : vector<16x16xi1>, vector<16x16xf32>
    %cst_46 = arith.constant 0.176776692 : f32
    %149 = vector.broadcast %cst_46 : f32 to vector<16x16xf32>
    %150 = arith.mulf %148, %149 : vector<16x16xf32>
    %cst_47 = arith.constant dense<0xFF800000> : vector<16xf32>
    %151 = vector.multi_reduction <maximumf>, %150, %cst_47 [1] : vector<16x16xf32> to vector<16xf32>
    %152 = vector.shape_cast %151 : vector<16xf32> to vector<16x1xf32>
    %153 = vector.broadcast %152 : vector<16x1xf32> to vector<16x16xf32>
    %154 = arith.subf %150, %153 : vector<16x16xf32>
    %155 = math.exp %154 : vector<16x16xf32>
    %cst_48 = arith.constant dense<0.000000e+00> : vector<16xf32>
    %156 = vector.multi_reduction <add>, %155, %cst_48 [1] : vector<16x16xf32> to vector<16xf32>
    %157 = vector.shape_cast %156 : vector<16xf32> to vector<16x1xf32>
    %158 = tpu.reciprocal %157 {approx = true} : vector<16x1xf32> -> vector<16x1xf32>
    %159 = vector.broadcast %158 : vector<16x1xf32> to vector<16x16xf32>
    %160 = arith.mulf %155, %159 : vector<16x16xf32>
    %161 = vector.extract_strided_slice %97 {offsets = [0, 16], sizes = [16, 8], strides = [1, 1]} : vector<16x32xf32> to vector<16x8xf32>
    %162 = tpu.concatenate %161, %161 in 1 : vector<16x8xf32>, vector<16x8xf32> -> vector<16x16xf32>
    %cst_49 = arith.constant 0.000000e+00 : f32
    %163 = vector.broadcast %cst_49 : f32 to vector<16x16xf32>
    %164 = arith.select %27, %162, %163 : vector<16x16xi1>, vector<16x16xf32>
    %165 = arith.addf %160, %164 : vector<16x16xf32>
    %cst_50 = arith.constant dense<0.000000e+00> : vector<16x32xf32>
    %166 = tpu.matmul %165, %146, %cst_50 {dimension_numbers = #tpu.dot_dimension_numbers<[1], [0], [0], [1], [0, 0, 1, 1], [], []>} : vector<16x16xf32>, vector<16x32xf32>, vector<16x32xf32> -> vector<16x32xf32>
    %167 = vector.extract_strided_slice %19 {offsets = [0, 96], sizes = [16, 32], strides = [1, 1]} : vector<16x128xf32> to vector<16x32xf32>
    %168 = vector.extract_strided_slice %14 {offsets = [0, 96], sizes = [16, 32], strides = [1, 1]} : vector<16x128xf32> to vector<16x32xf32>
    %169 = vector.extract_strided_slice %9 {offsets = [0, 96], sizes = [16, 32], strides = [1, 1]} : vector<16x128xf32> to vector<16x32xf32>
    %cst_51 = arith.constant dense<0.000000e+00> : vector<16x16xf32>
    %170 = tpu.matmul %167, %168, %cst_51 {dimension_numbers = #tpu.dot_dimension_numbers<[1], [1], [0], [0], [0, 0, 1, 0], [], []>} : vector<16x32xf32>, vector<16x32xf32>, vector<16x16xf32> -> vector<16x16xf32>
    %171 = arith.select %35, %170, %38 : vector<16x16xi1>, vector<16x16xf32>
    %cst_52 = arith.constant 0.176776692 : f32
    %172 = vector.broadcast %cst_52 : f32 to vector<16x16xf32>
    %173 = arith.mulf %171, %172 : vector<16x16xf32>
    %cst_53 = arith.constant dense<0xFF800000> : vector<16xf32>
    %174 = vector.multi_reduction <maximumf>, %173, %cst_53 [1] : vector<16x16xf32> to vector<16xf32>
    %175 = vector.shape_cast %174 : vector<16xf32> to vector<16x1xf32>
    %176 = vector.broadcast %175 : vector<16x1xf32> to vector<16x16xf32>
    %177 = arith.subf %173, %176 : vector<16x16xf32>
    %178 = math.exp %177 : vector<16x16xf32>
    %cst_54 = arith.constant dense<0.000000e+00> : vector<16xf32>
    %179 = vector.multi_reduction <add>, %178, %cst_54 [1] : vector<16x16xf32> to vector<16xf32>
    %180 = vector.shape_cast %179 : vector<16xf32> to vector<16x1xf32>
    %181 = tpu.reciprocal %180 {approx = true} : vector<16x1xf32> -> vector<16x1xf32>
    %182 = vector.broadcast %181 : vector<16x1xf32> to vector<16x16xf32>
    %183 = arith.mulf %178, %182 : vector<16x16xf32>
    %184 = vector.extract_strided_slice %97 {offsets = [0, 24], sizes = [16, 8], strides = [1, 1]} : vector<16x32xf32> to vector<16x8xf32>
    %185 = tpu.concatenate %184, %184 in 1 : vector<16x8xf32>, vector<16x8xf32> -> vector<16x16xf32>
    %cst_55 = arith.constant 0.000000e+00 : f32
    %186 = vector.broadcast %cst_55 : f32 to vector<16x16xf32>
    %187 = arith.select %27, %185, %186 : vector<16x16xi1>, vector<16x16xf32>
    %188 = arith.addf %183, %187 : vector<16x16xf32>
    %cst_56 = arith.constant dense<0.000000e+00> : vector<16x32xf32>
    %189 = tpu.matmul %188, %169, %cst_56 {dimension_numbers = #tpu.dot_dimension_numbers<[1], [0], [0], [1], [0, 0, 1, 1], [], []>} : vector<16x16xf32>, vector<16x32xf32>, vector<16x32xf32> -> vector<16x32xf32>
    %190 = tpu.concatenate %120, %143, %166, %189 in 1 : vector<16x32xf32>, vector<16x32xf32>, vector<16x32xf32>, vector<16x32xf32> -> vector<16x128xf32>
    %c384 = arith.constant 384 : index
    %c0_57 = arith.constant 0 : index
    %191 = vector.load %arg3[%c384, %c0_57] : memref<776x128xf32, #tpu.memory_space<vmem>>, vector<128x128xf32>
    %cst_58 = arith.constant dense<0.000000e+00> : vector<16x128xf32>
    %192 = tpu.matmul %190, %191, %cst_58 {dimension_numbers = #tpu.dot_dimension_numbers<[1], [0], [0], [1], [0, 0, 1, 1], [], []>} : vector<16x128xf32>, vector<128x128xf32>, vector<16x128xf32> -> vector<16x128xf32>
    %193 = vector.broadcast %4 : vector<1x128xf32> to vector<16x128xf32>
    %194 = arith.addf %192, %193 : vector<16x128xf32>
    %c0_59 = arith.constant 0 : index
    %c0_60 = arith.constant 0 : index
    %195 = vector.load %arg4[%c0_59, %c0_60] : memref<16x128xf32, #tpu.memory_space<vmem>>, vector<16x128xf32>
    tpu.vector_store %arg4[%c0_59, %c0_60], %194 {strides = array<i32>} : memref<16x128xf32, #tpu.memory_space<vmem>>, vector<16x128xf32>,
    return
  }
}

</mosaic_0001>

<llo_original>
// kernel: cross_attention.1
$region0: #{cross_attention.1}
  #allocation0 [shape = 'u32[]', space=smem, size = 0x4, offset = 0x4, fixed_abs, tag = 'smem constant byte address 0x4 - core index']
  #allocation1 [shape = 'u32[144,128]{1,0:T(1,128)}', space=vmem, size = 0x12000, scoped, tag = 'internal scratch']
  %s0 = inlined_call_operand.vmem [shape: f32[16,128], index: 0, kind: input, shape index: {}]
  %s1 = inlined_call_operand.vmem [shape: f32[16,128], index: 1, kind: input, shape index: {}]
  %s2 = inlined_call_operand.vmem [shape: f32[16,128], index: 2, kind: input, shape index: {}]
  %s3 = inlined_call_operand.hbm [shape: f32[776,128], index: 3, kind: input, shape index: {}]
  %s4 = inlined_call_operand.vmem [shape: f32[16,128], index: 4, kind: output, shape index: {}]
  %s5 = sld [smem:[#allocation0]]
  $region30: #{cross_attention.1} parent=0
    _
  %s7 = ssub.s32 1, %s5
  %s8 = scalar_select 0, %s7, %s5
  $region1: #{cross_attention.1} parent=0
    #allocation2 [shape = 'u8[397312]{0}', space=vmem, size = 0x61000, scoped, tag = 'input window, operand 3, single buffered']
    #allocation3 [shape = 's32[1]{0}', space=sflag, size = 0x4, scoped, tag = 'scoped memory for cross_attention.1']
    %9 = vsyncpa [#allocation3], 0
    // Predicated region
    $region2: #{cross_attention.1} parent=1 // pred_check
      _
    $region3: #{cross_attention.1} parent=1 // pred_check_branch
      %11 = sbr.rel (0) target = $region5
    $region4: #{cross_attention.1} parent=1 // pred_region
      _
    $region5: #{cross_attention.1} parent=1 // pred_fallthru
      _
    // Predicated region
    $region6: #{cross_attention.1} parent=1 // pred_check
      _
    $region7: #{cross_attention.1} parent=1 // pred_check_branch
      %13 = sbr.rel (0) target = $region9
    $region8: #{cross_attention.1} parent=1 // pred_region
      _
    $region9: #{cross_attention.1} parent=1 // pred_fallthru
      _
    // Predicated region
    $region10: #{cross_attention.1} parent=1 // pred_check
      _
    $region11: #{cross_attention.1} parent=1 // pred_check_branch
      %15 = sbr.rel (0) target = $region13
    $region12: #{cross_attention.1} parent=1 // pred_region
      _
    $region13: #{cross_attention.1} parent=1 // pred_fallthru
      _
    // Predicated region
    $region14: #{cross_attention.1} parent=1 // pred_check
      _
    $region15: #{cross_attention.1} parent=1 // pred_check_branch
      %17 = sbr.rel (0) target = $region17
    $region16: #{cross_attention.1} parent=1 // pred_region
      %s19 = ssub.s32 12416, 12416
      %20 = vsyncadd [#allocation3], %s19
      %s21 = sshll.u32 [#allocation2], 4
      %s22 = int_to_ptr.vmem [resolvable:$true] %s21
      %27 = dma.hbm_to_vmem [thread:$0]  %s3, 12416, %s22, [#allocation3], 128, 128, 8
    $region17: #{cross_attention.1} parent=1 // pred_fallthru
      _
    // Predicated region
    $region18: #{cross_attention.1} parent=1 // pred_check
      _
    $region19: #{cross_attention.1} parent=1 // pred_check_branch
      %29 = sbr.rel (0) target = $region21
    $region20: #{cross_attention.1} parent=1 // pred_region
      %30 = dma.done [#allocation3], 12416
    $region21: #{cross_attention.1} parent=1 // pred_fallthru
      _
    %v31 = vld [vmem:[#allocation2 + $0x300] sm:$0xff]
    %v32 = vld [vmem:[%s0] sm:$0xff]
    %v33 = vld [vmem:[%s0 + $0x8] sm:$0xff]
    %v34 = vld [vmem:[#allocation2] sm:$0xff]
    %v35 = vld [vmem:[#allocation2 + $0x8] sm:$0xff]
    %v36 = vld [vmem:[#allocation2 + $0x10] sm:$0xff]
    %v37 = vld [vmem:[#allocation2 + $0x18] sm:$0xff]
    %v38 = vld [vmem:[#allocation2 + $0x20] sm:$0xff]
    %v39 = vld [vmem:[#allocation2 + $0x28] sm:$0xff]
    %v40 = vld [vmem:[#allocation2 + $0x30] sm:$0xff]
    %v41 = vld [vmem:[#allocation2 + $0x38] sm:$0xff]
    %v42 = vld [vmem:[#allocation2 + $0x40] sm:$0xff]
    %v43 = vld [vmem:[#allocation2 + $0x48] sm:$0xff]
    %v44 = vld [vmem:[#allocation2 + $0x50] sm:$0xff]
    %v45 = vld [vmem:[#allocation2 + $0x58] sm:$0xff]
    %v46 = vld [vmem:[#allocation2 + $0x60] sm:$0xff]
    %v47 = vld [vmem:[#allocation2 + $0x68] sm:$0xff]
    %v48 = vld [vmem:[#allocation2 + $0x70] sm:$0xff]
    %v49 = vld [vmem:[#allocation2 + $0x78] sm:$0xff]
    %v50 = vlaneseq
    %v51 = vshrl.u32 %v50, 7
    %v52 = vsub.s32 0, %v51
    %v53 = vrot.slane %v31, %v52
    %54 = vmatprep.subr.mxu0 0.0
    %55 = vmatpush1.msra.mxu0 %v34
    %56 = vmatprep.subr.mxu0 0.0
    %57 = vmatpush1.msra.mxu0 %v35
    %58 = vmatprep.subr.mxu0 0.0
    %59 = vmatpush1.msra.mxu0 %v36
    %60 = vmatprep.subr.mxu0 0.0
    %61 = vmatpush1.msra.mxu0 %v37
    %62 = vmatprep.subr.mxu0 0.0
    %63 = vmatpush1.msra.mxu0 %v38
    %64 = vmatprep.subr.mxu0 0.0
    %65 = vmatpush1.msra.mxu0 %v39
    %66 = vmatprep.subr.mxu0 0.0
    %67 = vmatpush1.msra.mxu0 %v40
    %68 = vmatprep.subr.mxu0 0.0
    %69 = vmatpush1.msra.mxu0 %v41
    %70 = vmatprep.subr.mxu0 0.0
    %71 = vmatpush1.msra.mxu0 %v42
    %72 = vmatprep.subr.mxu0 0.0
    %73 = vmatpush1.msra.mxu0 %v43
    %74 = vmatprep.subr.mxu0 0.0
    %75 = vmatpush1.msra.mxu0 %v44
    %76 = vmatprep.subr.mxu0 0.0
    %77 = vmatpush1.msra.mxu0 %v45
    %78 = vmatprep.subr.mxu0 0.0
    %79 = vmatpush1.msra.mxu0 %v46
    %80 = vmatprep.subr.mxu0 0.0
    %81 = vmatpush1.msra.mxu0 %v47
    %82 = vmatprep.subr.mxu0 0.0
    %83 = vmatpush1.msra.mxu0 %v48
    %84 = vmatprep.subr.mxu0 0.0
    %85 = vmatpush1.msra.mxu0 %v49
    %86 = vmatprep.subr.mxu0 0.0
    %87 = vmatpush1.msra.mxu0 0.0
    %88 = vmatprep.subr.mxu0 0.0
    %89 = vmatpush1.msra.mxu0 0.0
    %90 = vmatprep.subr.mxu0 0.0
    %91 = vmatpush1.msra.mxu0 0.0
    %92 = vmatprep.subr.mxu0 0.0
    %93 = vmatpush1.msra.mxu0 0.0
    %94 = vmatprep.subr.mxu0 0.0
    %95 = vmatpush1.msra.mxu0 0.0
    %96 = vmatprep.subr.mxu0 0.0
    %97 = vmatpush1.msra.mxu0 0.0
    %98 = vmatprep.subr.mxu0 0.0
    %99 = vmatpush1.msra.mxu0 0.0
    %100 = vmatprep.subr.mxu0 0.0
    %101 = vmatpush1.msra.mxu0 0.0
    %102 = vmatprep.subr.mxu0 0.0
    %103 = vmatpush1.msra.mxu0 0.0
    %104 = vmatprep.subr.mxu0 0.0
    %105 = vmatpush1.msra.mxu0 0.0
    %106 = vmatprep.subr.mxu0 0.0
    %107 = vmatpush1.msra.mxu0 0.0
    %108 = vmatprep.subr.mxu0 0.0
    %109 = vmatpush1.msra.mxu0 0.0
    %110 = vmatprep.subr.mxu0 0.0
    %111 = vmatpush1.msra.mxu0 0.0
    %112 = vmatprep.subr.mxu0 0.0
    %113 = vmatpush1.msra.mxu0 0.0
    %114 = vmatprep.subr.mxu0 0.0
    %115 = vmatpush1.msra.mxu0 0.0
    %116 = vmatprep.subr.mxu0 0.0
    %117 = vmatpush1.msra.mxu0 0.0
    %118 = vmatprep.mubr.f32.mxu0 0.0
    %119 = vmatmul.mubr.f32.gmra.mrb[0].mxu0 %v32
    %v120 = vpop.f32.mrb[0].mxu0
    %v121 = vadd.f32 %v53, %v120
    %v122 = vpop.f32.mrb[0].mxu0
    %123 = vmatprep.mubr.f32.mxu0 0.0
    %124 = vmatmul.mubr.f32.gmra.mrb[0].mxu0 %v33
    %v125 = vpop.f32.mrb[0].mxu0
    %v126 = vadd.f32 %v53, %v125
    %v127 = vpop.f32.mrb[0].mxu0
    %128 = vdwg.mxu0
    %v129 = vld [vmem:[%s1] sm:$0xff]
    %v130 = vld [vmem:[%s1 + $0x8] sm:$0xff]
    %v131 = vld [vmem:[#allocation2 + $0x80] sm:$0xff]
    %v132 = vld [vmem:[#allocation2 + $0x88] sm:$0xff]
    %v133 = vld [vmem:[#allocation2 + $0x90] sm:$0xff]
    %v134 = vld [vmem:[#allocation2 + $0x98] sm:$0xff]
    %v135 = vld [vmem:[#allocation2 + $0xa0] sm:$0xff]
    %v136 = vld [vmem:[#allocation2 + $0xa8] sm:$0xff]
    %v137 = vld [vmem:[#allocation2 + $0xb0] sm:$0xff]
    %v138 = vld [vmem:[#allocation2 + $0xb8] sm:$0xff]
    %v139 = vld [vmem:[#allocation2 + $0xc0] sm:$0xff]
    %v140 = vld [vmem:[#allocation2 + $0xc8] sm:$0xff]
    %v141 = vld [vmem:[#allocation2 + $0xd0] sm:$0xff]
    %v142 = vld [vmem:[#allocation2 + $0xd8] sm:$0xff]
    %v143 = vld [vmem:[#allocation2 + $0xe0] sm:$0xff]
    %v144 = vld [vmem:[#allocation2 + $0xe8] sm:$0xff]
    %v145 = vld [vmem:[#allocation2 + $0xf0] sm:$0xff]
    %v146 = vld [vmem:[#allocation2 + $0xf8] sm:$0xff]
    %v147 = vlaneseq
    %v148 = vshrl.u32 %v147, 7
    %v149 = vsub.s32 1, %v148
    %v150 = vrot.slane %v31, %v149
    %151 = vmatprep.subr.mxu0 0.0
    %152 = vmatpush1.msra.mxu0 %v131
    %153 = vmatprep.subr.mxu0 0.0
    %154 = vmatpush1.msra.mxu0 %v132
    %155 = vmatprep.subr.mxu0 0.0
    %156 = vmatpush1.msra.mxu0 %v133
    %157 = vmatprep.subr.mxu0 0.0
    %158 = vmatpush1.msra.mxu0 %v134
    %159 = vmatprep.subr.mxu0 0.0
    %160 = vmatpush1.msra.mxu0 %v135
    %161 = vmatprep.subr.mxu0 0.0
    %162 = vmatpush1.msra.mxu0 %v136
    %163 = vmatprep.subr.mxu0 0.0
    %164 = vmatpush1.msra.mxu0 %v137
    %165 = vmatprep.subr.mxu0 0.0
    %166 = vmatpush1.msra.mxu0 %v138
    %167 = vmatprep.subr.mxu0 0.0
    %168 = vmatpush1.msra.mxu0 %v139
    %169 = vmatprep.subr.mxu0 0.0
    %170 = vmatpush1.msra.mxu0 %v140
    %171 = vmatprep.subr.mxu0 0.0
    %172 = vmatpush1.msra.mxu0 %v141
    %173 = vmatprep.subr.mxu0 0.0
    %174 = vmatpush1.msra.mxu0 %v142
    %175 = vmatprep.subr.mxu0 0.0
    %176 = vmatpush1.msra.mxu0 %v143
    %177 = vmatprep.subr.mxu0 0.0
    %178 = vmatpush1.msra.mxu0 %v144
    %179 = vmatprep.subr.mxu0 0.0
    %180 = vmatpush1.msra.mxu0 %v145
    %181 = vmatprep.subr.mxu0 0.0
    %182 = vmatpush1.msra.mxu0 %v146
    %183 = vmatprep.subr.mxu0 0.0
    %184 = vmatpush1.msra.mxu0 0.0
    %185 = vmatprep.subr.mxu0 0.0
    %186 = vmatpush1.msra.mxu0 0.0
    %187 = vmatprep.subr.mxu0 0.0
    %188 = vmatpush1.msra.mxu0 0.0
    %189 = vmatprep.subr.mxu0 0.0
    %190 = vmatpush1.msra.mxu0 0.0
    %191 = vmatprep.subr.mxu0 0.0
    %192 = vmatpush1.msra.mxu0 0.0
    %193 = vmatprep.subr.mxu0 0.0
    %194 = vmatpush1.msra.mxu0 0.0
    %195 = vmatprep.subr.mxu0 0.0
    %196 = vmatpush1.msra.mxu0 0.0
    %197 = vmatprep.subr.mxu0 0.0
    %198 = vmatpush1.msra.mxu0 0.0
    %199 = vmatprep.subr.mxu0 0.0
    %200 = vmatpush1.msra.mxu0 0.0
    %201 = vmatprep.subr.mxu0 0.0
    %202 = vmatpush1.msra.mxu0 0.0
    %203 = vmatprep.subr.mxu0 0.0
    %204 = vmatpush1.msra.mxu0 0.0
    %205 = vmatprep.subr.mxu0 0.0
    %206 = vmatpush1.msra.mxu0 0.0
    %207 = vmatprep.subr.mxu0 0.0
    %208 = vmatpush1.msra.mxu0 0.0
    %209 = vmatprep.subr.mxu0 0.0
    %210 = vmatpush1.msra.mxu0 0.0
    %211 = vmatprep.subr.mxu0 0.0
    %212 = vmatpush1.msra.mxu0 0.0
    %213 = vmatprep.subr.mxu0 0.0
    %214 = vmatpush1.msra.mxu0 0.0
    %215 = vmatprep.mubr.f32.mxu0 0.0
    %216 = vmatmul.mubr.f32.gmra.mrb[0].mxu0 %v129
    %v217 = vpop.f32.mrb[0].mxu0
    %v218 = vadd.f32 %v150, %v217
    %v219 = vpop.f32.mrb[0].mxu0
    %220 = vmatprep.mubr.f32.mxu0 0.0
    %221 = vmatmul.mubr.f32.gmra.mrb[0].mxu0 %v130
    %v222 = vpop.f32.mrb[0].mxu0
    %v223 = vadd.f32 %v150, %v222
    %v224 = vpop.f32.mrb[0].mxu0
    %225 = vdwg.mxu0
    %v226 = vld [vmem:[%s2] sm:$0xff]
    %v227 = vld [vmem:[%s2 + $0x8] sm:$0xff]
    %v228 = vld [vmem:[#allocation2 + $0x100] sm:$0xff]
    %v229 = vld [vmem:[#allocation2 + $0x108] sm:$0xff]
    %v230 = vld [vmem:[#allocation2 + $0x110] sm:$0xff]
    %v231 = vld [vmem:[#allocation2 + $0x118] sm:$0xff]
    %v232 = vld [vmem:[#allocation2 + $0x120] sm:$0xff]
    %v233 = vld [vmem:[#allocation2 + $0x128] sm:$0xff]
    %v234 = vld [vmem:[#allocation2 + $0x130] sm:$0xff]
    %v235 = vld [vmem:[#allocation2 + $0x138] sm:$0xff]
    %v236 = vld [vmem:[#allocation2 + $0x140] sm:$0xff]
    %v237 = vld [vmem:[#allocation2 + $0x148] sm:$0xff]
    %v238 = vld [vmem:[#allocation2 + $0x150] sm:$0xff]
    %v239 = vld [vmem:[#allocation2 + $0x158] sm:$0xff]
    %v240 = vld [vmem:[#allocation2 + $0x160] sm:$0xff]
    %v241 = vld [vmem:[#allocation2 + $0x168] sm:$0xff]
    %v242 = vld [vmem:[#allocation2 + $0x170] sm:$0xff]
    %v243 = vld [vmem:[#allocation2 + $0x178] sm:$0xff]
    %v244 = vlaneseq
    %v245 = vshrl.u32 %v244, 7
    %v246 = vsub.s32 2, %v245
    %v247 = vrot.slane %v31, %v246
    %248 = vmatprep.subr.mxu0 0.0
    %249 = vmatpush1.msra.mxu0 %v228
    %250 = vmatprep.subr.mxu0 0.0
    %251 = vmatpush1.msra.mxu0 %v229
    %252 = vmatprep.subr.mxu0 0.0
    %253 = vmatpush1.msra.mxu0 %v230
    %254 = vmatprep.subr.mxu0 0.0
    %255 = vmatpush1.msra.mxu0 %v231
    %256 = vmatprep.subr.mxu0 0.0
    %257 = vmatpush1.msra.mxu0 %v232
    %258 = vmatprep.subr.mxu0 0.0
    %259 = vmatpush1.msra.mxu0 %v233
    %260 = vmatprep.subr.mxu0 0.0
    %261 = vmatpush1.msra.mxu0 %v234
    %262 = vmatprep.subr.mxu0 0.0
    %263 = vmatpush1.msra.mxu0 %v235
    %264 = vmatprep.subr.mxu0 0.0
    %265 = vmatpush1.msra.mxu0 %v236
    %266 = vmatprep.subr.mxu0 0.0
    %267 = vmatpush1.msra.mxu0 %v237
    %268 = vmatprep.subr.mxu0 0.0
    %269 = vmatpush1.msra.mxu0 %v238
    %270 = vmatprep.subr.mxu0 0.0
    %271 = vmatpush1.msra.mxu0 %v239
    %272 = vmatprep.subr.mxu0 0.0
    %273 = vmatpush1.msra.mxu0 %v240
    %274 = vmatprep.subr.mxu0 0.0
    %275 = vmatpush1.msra.mxu0 %v241
    %276 = vmatprep.subr.mxu0 0.0
    %277 = vmatpush1.msra.mxu0 %v242
    %278 = vmatprep.subr.mxu0 0.0
    %279 = vmatpush1.msra.mxu0 %v243
    %280 = vmatprep.subr.mxu0 0.0
    %281 = vmatpush1.msra.mxu0 0.0
    %282 = vmatprep.subr.mxu0 0.0
    %283 = vmatpush1.msra.mxu0 0.0
    %284 = vmatprep.subr.mxu0 0.0
    %285 = vmatpush1.msra.mxu0 0.0
    %286 = vmatprep.subr.mxu0 0.0
    %287 = vmatpush1.msra.mxu0 0.0
    %288 = vmatprep.subr.mxu0 0.0
    %289 = vmatpush1.msra.mxu0 0.0
    %290 = vmatprep.subr.mxu0 0.0
    %291 = vmatpush1.msra.mxu0 0.0
    %292 = vmatprep.subr.mxu0 0.0
    %293 = vmatpush1.msra.mxu0 0.0
    %294 = vmatprep.subr.mxu0 0.0
    %295 = vmatpush1.msra.mxu0 0.0
    %296 = vmatprep.subr.mxu0 0.0
    %297 = vmatpush1.msra.mxu0 0.0
    %298 = vmatprep.subr.mxu0 0.0
    %299 = vmatpush1.msra.mxu0 0.0
    %300 = vmatprep.subr.mxu0 0.0
    %301 = vmatpush1.msra.mxu0 0.0
    %302 = vmatprep.subr.mxu0 0.0
    %303 = vmatpush1.msra.mxu0 0.0
    %304 = vmatprep.subr.mxu0 0.0
    %305 = vmatpush1.msra.mxu0 0.0
    %306 = vmatprep.subr.mxu0 0.0
    %307 = vmatpush1.msra.mxu0 0.0
    %308 = vmatprep.subr.mxu0 0.0
    %309 = vmatpush1.msra.mxu0 0.0
    %310 = vmatprep.subr.mxu0 0.0
    %311 = vmatpush1.msra.mxu0 0.0
    %312 = vmatprep.mubr.f32.mxu0 0.0
    %313 = vmatmul.mubr.f32.gmra.mrb[0].mxu0 %v226
    %v314 = vpop.f32.mrb[0].mxu0
    %v315 = vadd.f32 %v247, %v314
    %v316 = vpop.f32.mrb[0].mxu0
    %317 = vmatprep.mubr.f32.mxu0 0.0
    %318 = vmatmul.mubr.f32.gmra.mrb[0].mxu0 %v227
    %v319 = vpop.f32.mrb[0].mxu0
    %v320 = vadd.f32 %v247, %v319
    %v321 = vpop.f32.mrb[0].mxu0
    %322 = vdwg.mxu0
    %v323 = vlaneseq
    %v324 = vshrl.u32 %v323, 7
    %v325 = vadd.s32 %v324, 8
    %v326 = vlaneseq
    %v327 = vand.u32 %v326, 127
    %vm328 = vcmp.ge.s32.totalorder %v324, 8
    %vm329 = vcmp.ge.s32.totalorder %v325, 8
    %vm330 = vcmp.ge.s32.totalorder %v327, 8
    %vm331 = vmxor %vm328, %vm330
    %vm332 = vmxor %vm329, %vm330
    %vm333 = vmxor %vm331, 1
    %vm334 = vmxor %vm332, 1
    %v335 = vsub.s32 %v324, 8
    %v336 = vsel %vm328, %v335, %v324
    %v337 = vsel %vm329, %v324, %v325
    %v338 = vsub.s32 %v327, 8
    %v339 = vsel %vm330, %v338, %v327
    %vm340 = vcmp.gt.s32.totalorder %v339, %v336
    %vm341 = vcmp.gt.s32.totalorder %v339, %v337
    %vm342 = vmand %vm333, %vm340
    %vm343 = vmand %vm334, %vm341
    %v344 = vsel %vm333, -1e+20, -1e+30
    %v345 = vsel %vm334, -1e+20, -1e+30
    %v346 = vld [vmem:[#allocation2 + $0x200] sm:$0xff]
    %v347 = vld [vmem:[#allocation2 + $0x208] sm:$0xff]
    %v348 = vld [vmem:[#allocation2 + $0x210] sm:$0xff]
    %v349 = vld [vmem:[#allocation2 + $0x218] sm:$0xff]
    %v350 = vld [vmem:[#allocation2 + $0x220] sm:$0xff]
    %v351 = vld [vmem:[#allocation2 + $0x228] sm:$0xff]
    %v352 = vld [vmem:[#allocation2 + $0x230] sm:$0xff]
    %v353 = vld [vmem:[#allocation2 + $0x238] sm:$0xff]
    %v354 = vld [vmem:[#allocation2 + $0x240] sm:$0xff]
    %v355 = vld [vmem:[#allocation2 + $0x248] sm:$0xff]
    %v356 = vld [vmem:[#allocation2 + $0x250] sm:$0xff]
    %v357 = vld [vmem:[#allocation2 + $0x258] sm:$0xff]
    %v358 = vld [vmem:[#allocation2 + $0x260] sm:$0xff]
    %v359 = vld [vmem:[#allocation2 + $0x268] sm:$0xff]
    %v360 = vld [vmem:[#allocation2 + $0x270] sm:$0xff]
    %v361 = vld [vmem:[#allocation2 + $0x278] sm:$0xff]
    %362 = vmatprep.subr.mxu0 0.0
    %363 = vmatpush1.msra.mxu0 %v346
    %364 = vmatprep.subr.mxu0 0.0
    %365 = vmatpush1.msra.mxu0 %v347
    %366 = vmatprep.subr.mxu0 0.0
    %367 = vmatpush1.msra.mxu0 %v348
    %368 = vmatprep.subr.mxu0 0.0
    %369 = vmatpush1.msra.mxu0 %v349
    %370 = vmatprep.subr.mxu0 0.0
    %371 = vmatpush1.msra.mxu0 %v350
    %372 = vmatprep.subr.mxu0 0.0
    %373 = vmatpush1.msra.mxu0 %v351
    %374 = vmatprep.subr.mxu0 0.0
    %375 = vmatpush1.msra.mxu0 %v352
    %376 = vmatprep.subr.mxu0 0.0
    %377 = vmatpush1.msra.mxu0 %v353
    %378 = vmatprep.subr.mxu0 0.0
    %379 = vmatpush1.msra.mxu0 %v354
    %380 = vmatprep.subr.mxu0 0.0
    %381 = vmatpush1.msra.mxu0 %v355
    %382 = vmatprep.subr.mxu0 0.0
    %383 = vmatpush1.msra.mxu0 %v356
    %384 = vmatprep.subr.mxu0 0.0
    %385 = vmatpush1.msra.mxu0 %v357
    %386 = vmatprep.subr.mxu0 0.0
    %387 = vmatpush1.msra.mxu0 %v358
    %388 = vmatprep.subr.mxu0 0.0
    %389 = vmatpush1.msra.mxu0 %v359
    %390 = vmatprep.subr.mxu0 0.0
    %391 = vmatpush1.msra.mxu0 %v360
    %392 = vmatprep.subr.mxu0 0.0
    %393 = vmatpush1.msra.mxu0 %v361
    %394 = vmatprep.subr.mxu0 0.0
    %395 = vmatpush1.msra.mxu0 0.0
    %396 = vmatprep.subr.mxu0 0.0
    %397 = vmatpush1.msra.mxu0 0.0
    %398 = vmatprep.subr.mxu0 0.0
    %399 = vmatpush1.msra.mxu0 0.0
    %400 = vmatprep.subr.mxu0 0.0
    %401 = vmatpush1.msra.mxu0 0.0
    %402 = vmatprep.subr.mxu0 0.0
    %403 = vmatpush1.msra.mxu0 0.0
    %404 = vmatprep.subr.mxu0 0.0
    %405 = vmatpush1.msra.mxu0 0.0
    %406 = vmatprep.subr.mxu0 0.0
    %407 = vmatpush1.msra.mxu0 0.0
    %408 = vmatprep.subr.mxu0 0.0
    %409 = vmatpush1.msra.mxu0 0.0
    %410 = vmatprep.subr.mxu0 0.0
    %411 = vmatpush1.msra.mxu0 0.0
    %412 = vmatprep.subr.mxu0 0.0
    %413 = vmatpush1.msra.mxu0 0.0
    %414 = vmatprep.subr.mxu0 0.0
    %415 = vmatpush1.msra.mxu0 0.0
    %416 = vmatprep.subr.mxu0 0.0
    %417 = vmatpush1.msra.mxu0 0.0
    %418 = vmatprep.subr.mxu0 0.0
    %419 = vmatpush1.msra.mxu0 0.0
    %420 = vmatprep.subr.mxu0 0.0
    %421 = vmatpush1.msra.mxu0 0.0
    %422 = vmatprep.subr.mxu0 0.0
    %423 = vmatpush1.msra.mxu0 0.0
    %424 = vmatprep.subr.mxu0 0.0
    %425 = vmatpush1.msra.mxu0 0.0
    %426 = vmatprep.mubr.f32.mxu0 0.0
    %427 = vmatmul.mubr.f32.gmra.mrb[0].mxu0 %v121
    %v428 = vpop.f32.mrb[0].mxu0
    %v429 = vadd.f32 0.0, %v428
    %v430 = vpop.f32.mrb[0].mxu0
    %431 = vmatprep.mubr.f32.mxu0 0.0
    %432 = vmatmul.mubr.f32.gmra.mrb[0].mxu0 %v126
    %v433 = vpop.f32.mrb[0].mxu0
    %v434 = vadd.f32 0.0, %v433
    %v435 = vpop.f32.mrb[0].mxu0
    %436 = vdwg.mxu0
    %v437 = vld [vmem:[#allocation2 + $0x280] sm:$0xff]
    %v438 = vld [vmem:[#allocation2 + $0x288] sm:$0xff]
    %v439 = vld [vmem:[#allocation2 + $0x290] sm:$0xff]
    %v440 = vld [vmem:[#allocation2 + $0x298] sm:$0xff]
    %v441 = vld [vmem:[#allocation2 + $0x2a0] sm:$0xff]
    %v442 = vld [vmem:[#allocation2 + $0x2a8] sm:$0xff]
    %v443 = vld [vmem:[#allocation2 + $0x2b0] sm:$0xff]
    %v444 = vld [vmem:[#allocation2 + $0x2b8] sm:$0xff]
    %v445 = vld [vmem:[#allocation2 + $0x2c0] sm:$0xff]
    %v446 = vld [vmem:[#allocation2 + $0x2c8] sm:$0xff]
    %v447 = vld [vmem:[#allocation2 + $0x2d0] sm:$0xff]
    %v448 = vld [vmem:[#allocation2 + $0x2d8] sm:$0xff]
    %v449 = vld [vmem:[#allocation2 + $0x2e0] sm:$0xff]
    %v450 = vld [vmem:[#allocation2 + $0x2e8] sm:$0xff]
    %v451 = vld [vmem:[#allocation2 + $0x2f0] sm:$0xff]
    %v452 = vld [vmem:[#allocation2 + $0x2f8] sm:$0xff]
    %453 = vmatprep.subr.mxu0 0.0
    %454 = vmatpush1.msra.mxu0 %v437
    %455 = vmatprep.subr.mxu0 0.0
    %456 = vmatpush1.msra.mxu0 %v438
    %457 = vmatprep.subr.mxu0 0.0
    %458 = vmatpush1.msra.mxu0 %v439
    %459 = vmatprep.subr.mxu0 0.0
    %460 = vmatpush1.msra.mxu0 %v440
    %461 = vmatprep.subr.mxu0 0.0
    %462 = vmatpush1.msra.mxu0 %v441
    %463 = vmatprep.subr.mxu0 0.0
    %464 = vmatpush1.msra.mxu0 %v442
    %465 = vmatprep.subr.mxu0 0.0
    %466 = vmatpush1.msra.mxu0 %v443
    %467 = vmatprep.subr.mxu0 0.0
    %468 = vmatpush1.msra.mxu0 %v444
    %469 = vmatprep.subr.mxu0 0.0
    %470 = vmatpush1.msra.mxu0 %v445
    %471 = vmatprep.subr.mxu0 0.0
    %472 = vmatpush1.msra.mxu0 %v446
    %473 = vmatprep.subr.mxu0 0.0
    %474 = vmatpush1.msra.mxu0 %v447
    %475 = vmatprep.subr.mxu0 0.0
    %476 = vmatpush1.msra.mxu0 %v448
    %477 = vmatprep.subr.mxu0 0.0
    %478 = vmatpush1.msra.mxu0 %v449
    %479 = vmatprep.subr.mxu0 0.0
    %480 = vmatpush1.msra.mxu0 %v450
    %481 = vmatprep.subr.mxu0 0.0
    %482 = vmatpush1.msra.mxu0 %v451
    %483 = vmatprep.subr.mxu0 0.0
    %484 = vmatpush1.msra.mxu0 %v452
    %485 = vmatprep.subr.mxu0 0.0
    %486 = vmatpush1.msra.mxu0 0.0
    %487 = vmatprep.subr.mxu0 0.0
    %488 = vmatpush1.msra.mxu0 0.0
    %489 = vmatprep.subr.mxu0 0.0
    %490 = vmatpush1.msra.mxu0 0.0
    %491 = vmatprep.subr.mxu0 0.0
    %492 = vmatpush1.msra.mxu0 0.0
    %493 = vmatprep.subr.mxu0 0.0
    %494 = vmatpush1.msra.mxu0 0.0
    %495 = vmatprep.subr.mxu0 0.0
    %496 = vmatpush1.msra.mxu0 0.0
    %497 = vmatprep.subr.mxu0 0.0
    %498 = vmatpush1.msra.mxu0 0.0
    %499 = vmatprep.subr.mxu0 0.0
    %500 = vmatpush1.msra.mxu0 0.0
    %501 = vmatprep.subr.mxu0 0.0
    %502 = vmatpush1.msra.mxu0 0.0
    %503 = vmatprep.subr.mxu0 0.0
    %504 = vmatpush1.msra.mxu0 0.0
    %505 = vmatprep.subr.mxu0 0.0
    %506 = vmatpush1.msra.mxu0 0.0
    %507 = vmatprep.subr.mxu0 0.0
    %508 = vmatpush1.msra.mxu0 0.0
    %509 = vmatprep.subr.mxu0 0.0
    %510 = vmatpush1.msra.mxu0 0.0
    %511 = vmatprep.subr.mxu0 0.0
    %512 = vmatpush1.msra.mxu0 0.0
    %513 = vmatprep.subr.mxu0 0.0
    %514 = vmatpush1.msra.mxu0 0.0
    %515 = vmatprep.subr.mxu0 0.0
    %516 = vmatpush1.msra.mxu0 0.0
    %517 = vmatprep.mubr.f32.mxu0 0.0
    %518 = vmatmul.mubr.f32.gmra.mrb[0].mxu0 %v121
    %v519 = vpop.f32.mrb[0].mxu0
    %v520 = vadd.f32 0.0, %v519
    %v521 = vpop.f32.mrb[0].mxu0
    %522 = vmatprep.mubr.f32.mxu0 0.0
    %523 = vmatmul.mubr.f32.gmra.mrb[0].mxu0 %v126
    %v524 = vpop.f32.mrb[0].mxu0
    %v525 = vadd.f32 0.0, %v524
    %v526 = vpop.f32.mrb[0].mxu0
    %527 = vdwg.mxu0
    %vm528 = vcmp.eq.s32.totalorder %v336, 0
    %vm529 = vcmp.eq.s32.totalorder %v337, 0
    %v530 = vsel %vm528, %v429, 0.0
    %v531 = vsel %vm529, %v434, 0.0
    %v532 = vadd.f32 %v530, 0.0
    %v533 = vadd.f32 %v531, 0.0
    %vm534 = vcmp.eq.s32.totalorder %v336, 1
    %vm535 = vcmp.eq.s32.totalorder %v337, 1
    %v536 = vsel %vm534, %v429, 0.0
    %v537 = vsel %vm535, %v434, 0.0
    %540 = vrot.lane.b32.xlu0 %v536, 96
    %v541 = vpop.permute.xlu0 %540
    %542 = vrot.lane.b32.xlu0 %v537, 96
    %v543 = vpop.permute.xlu0 %542
    %v546 = vadd.f32 %v532, %v541
    %v547 = vadd.f32 %v533, %v543
    %vm548 = vcmp.eq.s32.totalorder %v336, 2
    %vm549 = vcmp.eq.s32.totalorder %v337, 2
    %v550 = vsel %vm548, %v429, 0.0
    %v551 = vsel %vm549, %v434, 0.0
    %554 = vrot.lane.b32.xlu0 %v550, 64
    %v555 = vpop.permute.xlu0 %554
    %556 = vrot.lane.b32.xlu0 %v551, 64
    %v557 = vpop.permute.xlu0 %556
    %v560 = vadd.f32 %v546, %v555
    %v561 = vadd.f32 %v547, %v557
    %vm562 = vcmp.eq.s32.totalorder %v336, 3
    %vm563 = vcmp.eq.s32.totalorder %v337, 3
    %v564 = vsel %vm562, %v429, 0.0
    %v565 = vsel %vm563, %v434, 0.0
    %568 = vrot.lane.b32.xlu0 %v564, 32
    %v569 = vpop.permute.xlu0 %568
    %570 = vrot.lane.b32.xlu0 %v565, 32
    %v571 = vpop.permute.xlu0 %570
    %v574 = vadd.f32 %v560, %v569
    %v575 = vadd.f32 %v561, %v571
    %vm576 = vcmp.eq.s32.totalorder %v336, 4
    %vm577 = vcmp.eq.s32.totalorder %v337, 4
    %v578 = vsel %vm576, %v520, 0.0
    %v579 = vsel %vm577, %v525, 0.0
    %v580 = vadd.f32 %v574, %v578
    %v581 = vadd.f32 %v575, %v579
    %vm582 = vcmp.eq.s32.totalorder %v336, 5
    %vm583 = vcmp.eq.s32.totalorder %v337, 5
    %v584 = vsel %vm582, %v520, 0.0
    %v585 = vsel %vm583, %v525, 0.0
    %588 = vrot.lane.b32.xlu0 %v584, 96
    %v589 = vpop.permute.xlu0 %588
    %590 = vrot.lane.b32.xlu0 %v585, 96
    %v591 = vpop.permute.xlu0 %590
    %v594 = vadd.f32 %v580, %v589
    %v595 = vadd.f32 %v581, %v591
    %vm596 = vcmp.eq.s32.totalorder %v336, 6
    %vm597 = vcmp.eq.s32.totalorder %v337, 6
    %v598 = vsel %vm596, %v520, 0.0
    %v599 = vsel %vm597, %v525, 0.0
    %602 = vrot.lane.b32.xlu0 %v598, 64
    %v603 = vpop.permute.xlu0 %602
    %604 = vrot.lane.b32.xlu0 %v599, 64
    %v605 = vpop.permute.xlu0 %604
    %v608 = vadd.f32 %v594, %v603
    %v609 = vadd.f32 %v595, %v605
    %vm610 = vcmp.eq.s32.totalorder %v336, 7
    %vm611 = vcmp.eq.s32.totalorder %v337, 7
    %v612 = vsel %vm610, %v520, 0.0
    %v613 = vsel %vm611, %v525, 0.0
    %616 = vrot.lane.b32.xlu0 %v612, 32
    %v617 = vpop.permute.xlu0 %616
    %618 = vrot.lane.b32.xlu0 %v613, 32
    %v619 = vpop.permute.xlu0 %618
    %v622 = vadd.f32 %v608, %v617
    %v623 = vadd.f32 %v609, %v619
    %vm624 = vcmask 261120
    %v626 = vsel %vm624, %v315, 0
    %v629 = vsel %vm624, %v320, 0
    %v632 = vsel %vm624, %v218, 0
    %v635 = vsel %vm624, %v223, 0
    %637 = vmatprep.subr.mxu0 0.0
    %638 = vmatpush1.xpose.msra.mxu0 %v632
    %639 = vmatprep.subr.mxu0 0.0
    %640 = vmatpush1.xpose.msra.mxu0 %v635
    %641 = vmatprep.subr.mxu0 0.0
    %642 = vmatpush1.xpose.msra.mxu0 0.0
    %643 = vmatprep.subr.mxu0 0.0
    %644 = vmatpush1.xpose.msra.mxu0 0.0
    %645 = vmatprep.subr.mxu0 0.0
    %646 = vmatpush1.xpose.msra.mxu0 0.0
    %647 = vmatprep.subr.mxu0 0.0
    %648 = vmatpush1.xpose.msra.mxu0 0.0
    %649 = vmatprep.subr.mxu0 0.0
    %650 = vmatpush1.xpose.msra.mxu0 0.0
    %651 = vmatprep.subr.mxu0 0.0
    %652 = vmatpush1.xpose.msra.mxu0 0.0
    %653 = vmatprep.subr.mxu0 0.0
    %654 = vmatpush1.xpose.msra.mxu0 0.0
    %655 = vmatprep.subr.mxu0 0.0
    %656 = vmatpush1.xpose.msra.mxu0 0.0
    %657 = vmatprep.subr.mxu0 0.0
    %658 = vmatpush1.xpose.msra.mxu0 0.0
    %659 = vmatprep.subr.mxu0 0.0
    %660 = vmatpush1.xpose.msra.mxu0 0.0
    %661 = vmatprep.subr.mxu0 0.0
    %662 = vmatpush1.xpose.msra.mxu0 0.0
    %663 = vmatprep.subr.mxu0 0.0
    %664 = vmatpush1.xpose.msra.mxu0 0.0
    %665 = vmatprep.subr.mxu0 0.0
    %666 = vmatpush1.xpose.msra.mxu0 0.0
    %667 = vmatprep.subr.mxu0 0.0
    %668 = vmatpush1.xpose.msra.mxu0 0.0
    %669 = vmatprep.subr.mxu0 0.0
    %670 = vmatpush1.xpose.msra.mxu0 0.0
    %671 = vmatprep.subr.mxu0 0.0
    %672 = vmatpush1.xpose.msra.mxu0 0.0
    %673 = vmatprep.subr.mxu0 0.0
    %674 = vmatpush1.xpose.msra.mxu0 0.0
    %675 = vmatprep.subr.mxu0 0.0
    %676 = vmatpush1.xpose.msra.mxu0 0.0
    %677 = vmatprep.subr.mxu0 0.0
    %678 = vmatpush1.xpose.msra.mxu0 0.0
    %679 = vmatprep.subr.mxu0 0.0
    %680 = vmatpush1.xpose.msra.mxu0 0.0
    %681 = vmatprep.subr.mxu0 0.0
    %682 = vmatpush1.xpose.msra.mxu0 0.0
    %683 = vmatprep.subr.mxu0 0.0
    %684 = vmatpush1.xpose.msra.mxu0 0.0
    %685 = vmatprep.subr.mxu0 0.0
    %686 = vmatpush1.xpose.msra.mxu0 0.0
    %687 = vmatprep.subr.mxu0 0.0
    %688 = vmatpush1.xpose.msra.mxu0 0.0
    %689 = vmatprep.subr.mxu0 0.0
    %690 = vmatpush1.xpose.msra.mxu0 0.0
    %691 = vmatprep.subr.mxu0 0.0
    %692 = vmatpush1.xpose.msra.mxu0 0.0
    %693 = vmatprep.subr.mxu0 0.0
    %694 = vmatpush1.xpose.msra.mxu0 0.0
    %695 = vmatprep.subr.mxu0 0.0
    %696 = vmatpush1.xpose.msra.mxu0 0.0
    %697 = vmatprep.subr.mxu0 0.0
    %698 = vmatpush1.xpose.msra.mxu0 0.0
    %699 = vmatprep.subr.mxu0 0.0
    %700 = vmatpush1.xpose.msra.mxu0 0.0
    %701 = vmatprep.mubr.f32.mxu0 0.0
    %702 = vmatmul.mubr.f32.gmra.mrb[0].mxu0 %v626
    %v703 = vpop.f32.mrb[0].mxu0
    %v704 = vadd.f32 0.0, %v703
    %v705 = vpop.f32.mrb[0].mxu0
    %706 = vmatprep.mubr.f32.mxu0 0.0
    %707 = vmatmul.mubr.f32.gmra.mrb[0].mxu0 %v629
    %v708 = vpop.f32.mrb[0].mxu0
    %v709 = vadd.f32 0.0, %v708
    %v710 = vpop.f32.mrb[0].mxu0
    %711 = vdwg.mxu0
    %v712 = vsel %vm342, %v704, %v344
    %v713 = vsel %vm343, %v709, %v345
    %v714 = vmul.f32 %v712, 0.17677669
    %v715 = vmul.f32 %v713, 0.17677669
    %vm716 = vcmask 130048
    %v717 = vsel %vm716, %v714, -inf
    %718 = vmax.xlane.f32.xlu0 %v717
    %v719 = vpop.xlane.xlu0 %718
    %v720 = vsel %vm716, %v715, -inf
    %721 = vmax.xlane.f32.xlu0 %v720
    %v722 = vpop.xlane.xlu0 %721
    %v723 = vsub.f32 %v714, %v719
    %v724 = vsub.f32 %v715, %v722
    %v725 = vmul.f32 %v723, 1.442695
    %v726 = vpow.pop %v725
    %v727 = vmul.f32 %v724, 1.442695
    %v728 = vpow.pop %v727
    %v729 = vsel %vm716, %v726, 0.0
    %730 = vadd.xlane.f32.xlu0 %v729
    %v731 = vpop.xlane.xlu0 %730
    %v732 = vsel %vm716, %v728, 0.0
    %733 = vadd.xlane.f32.xlu0 %v732
    %v734 = vpop.xlane.xlu0 %733
    %v735 = vrcp.pop %v731
    %v736 = vrcp.pop %v734
    %v737 = vmul.f32 %v726, %v735
    %v738 = vmul.f32 %v728, %v736
    %741 = vrot.lane.b32.xlu0 %v622, 8
    %v742 = vpop.permute.xlu0 %741
    %743 = vrot.lane.b32.xlu0 %v623, 8
    %v744 = vpop.permute.xlu0 %743
    %vm747 = vcmask 64512
    %v748 = vsel %vm747, %v622, %v742
    %v749 = vsel %vm747, %v623, %v744
    %v750 = vsel %vm333, %v748, 0.0
    %v751 = vsel %vm334, %v749, 0.0
    %v752 = vadd.f32 %v737, %v750
    %v753 = vadd.f32 %v738, %v751
    %v755 = vsel %vm716, %v752, 0
    %v758 = vsel %vm716, %v753, 0
    %760 = vmatprep.subr.mxu0 0.0
    %761 = vmatpush1.msra.mxu0 %v121
    %762 = vmatprep.subr.mxu0 0.0
    %763 = vmatpush1.msra.mxu0 %v126
    %764 = vmatprep.subr.mxu0 0.0
    %765 = vmatpush1.msra.mxu0 0.0
    %766 = vmatprep.subr.mxu0 0.0
    %767 = vmatpush1.msra.mxu0 0.0
    %768 = vmatprep.subr.mxu0 0.0
    %769 = vmatpush1.msra.mxu0 0.0
    %770 = vmatprep.subr.mxu0 0.0
    %771 = vmatpush1.msra.mxu0 0.0
    %772 = vmatprep.subr.mxu0 0.0
    %773 = vmatpush1.msra.mxu0 0.0
    %774 = vmatprep.subr.mxu0 0.0
    %775 = vmatpush1.msra.mxu0 0.0
    %776 = vmatprep.subr.mxu0 0.0
    %777 = vmatpush1.msra.mxu0 0.0
    %778 = vmatprep.subr.mxu0 0.0
    %779 = vmatpush1.msra.mxu0 0.0
    %780 = vmatprep.subr.mxu0 0.0
    %781 = vmatpush1.msra.mxu0 0.0
    %782 = vmatprep.subr.mxu0 0.0
    %783 = vmatpush1.msra.mxu0 0.0
    %784 = vmatprep.subr.mxu0 0.0
    %785 = vmatpush1.msra.mxu0 0.0
    %786 = vmatprep.subr.mxu0 0.0
    %787 = vmatpush1.msra.mxu0 0.0
    %788 = vmatprep.subr.mxu0 0.0
    %789 = vmatpush1.msra.mxu0 0.0
    %790 = vmatprep.subr.mxu0 0.0
    %791 = vmatpush1.msra.mxu0 0.0
    %792 = vmatprep.subr.mxu0 0.0
    %793 = vmatpush1.msra.mxu0 0.0
    %794 = vmatprep.subr.mxu0 0.0
    %795 = vmatpush1.msra.mxu0 0.0
    %796 = vmatprep.subr.mxu0 0.0
    %797 = vmatpush1.msra.mxu0 0.0
    %798 = vmatprep.subr.mxu0 0.0
    %799 = vmatpush1.msra.mxu0 0.0
    %800 = vmatprep.subr.mxu0 0.0
    %801 = vmatpush1.msra.mxu0 0.0
    %802 = vmatprep.subr.mxu0 0.0
    %803 = vmatpush1.msra.mxu0 0.0
    %804 = vmatprep.subr.mxu0 0.0
    %805 = vmatpush1.msra.mxu0 0.0
    %806 = vmatprep.subr.mxu0 0.0
    %807 = vmatpush1.msra.mxu0 0.0
    %808 = vmatprep.subr.mxu0 0.0
    %809 = vmatpush1.msra.mxu0 0.0
    %810 = vmatprep.subr.mxu0 0.0
    %811 = vmatpush1.msra.mxu0 0.0
    %812 = vmatprep.subr.mxu0 0.0
    %813 = vmatpush1.msra.mxu0 0.0
    %814 = vmatprep.subr.mxu0 0.0
    %815 = vmatpush1.msra.mxu0 0.0
    %816 = vmatprep.subr.mxu0 0.0
    %817 = vmatpush1.msra.mxu0 0.0
    %818 = vmatprep.subr.mxu0 0.0
    %819 = vmatpush1.msra.mxu0 0.0
    %820 = vmatprep.subr.mxu0 0.0
    %821 = vmatpush1.msra.mxu0 0.0
    %822 = vmatprep.subr.mxu0 0.0
    %823 = vmatpush1.msra.mxu0 0.0
    %824 = vmatprep.mubr.f32.mxu0 0.0
    %825 = vmatmul.mubr.f32.gmra.mrb[0].mxu0 %v755
    %v826 = vpop.f32.mrb[0].mxu0
    %v827 = vadd.f32 0.0, %v826
    %v828 = vpop.f32.mrb[0].mxu0
    %829 = vmatprep.mubr.f32.mxu0 0.0
    %830 = vmatmul.mubr.f32.gmra.mrb[0].mxu0 %v758
    %v831 = vpop.f32.mrb[0].mxu0
    %v832 = vadd.f32 0.0, %v831
    %v833 = vpop.f32.mrb[0].mxu0
    %834 = vdwg.mxu0
    %835 = vrot.lane.b32.xlu0 %v315, 96
    %v836 = vpop.permute.xlu0 %835
    %837 = vrot.lane.b32.xlu0 %v320, 96
    %v838 = vpop.permute.xlu0 %837
    %839 = vrot.lane.b32.xlu0 %v218, 96
    %v840 = vpop.permute.xlu0 %839
    %841 = vrot.lane.b32.xlu0 %v223, 96
    %v842 = vpop.permute.xlu0 %841
    %v843 = vsel %vm624, %v836, 0
    %v845 = vsel %vm624, %v838, 0
    %v847 = vsel %vm624, %v840, 0
    %v849 = vsel %vm624, %v842, 0
    %851 = vmatprep.subr.mxu0 0.0
    %852 = vmatpush1.xpose.msra.mxu0 %v847
    %853 = vmatprep.subr.mxu0 0.0
    %854 = vmatpush1.xpose.msra.mxu0 %v849
    %855 = vmatprep.subr.mxu0 0.0
    %856 = vmatpush1.xpose.msra.mxu0 0.0
    %857 = vmatprep.subr.mxu0 0.0
    %858 = vmatpush1.xpose.msra.mxu0 0.0
    %859 = vmatprep.subr.mxu0 0.0
    %860 = vmatpush1.xpose.msra.mxu0 0.0
    %861 = vmatprep.subr.mxu0 0.0
    %862 = vmatpush1.xpose.msra.mxu0 0.0
    %863 = vmatprep.subr.mxu0 0.0
    %864 = vmatpush1.xpose.msra.mxu0 0.0
    %865 = vmatprep.subr.mxu0 0.0
    %866 = vmatpush1.xpose.msra.mxu0 0.0
    %867 = vmatprep.subr.mxu0 0.0
    %868 = vmatpush1.xpose.msra.mxu0 0.0
    %869 = vmatprep.subr.mxu0 0.0
    %870 = vmatpush1.xpose.msra.mxu0 0.0
    %871 = vmatprep.subr.mxu0 0.0
    %872 = vmatpush1.xpose.msra.mxu0 0.0
    %873 = vmatprep.subr.mxu0 0.0
    %874 = vmatpush1.xpose.msra.mxu0 0.0
    %875 = vmatprep.subr.mxu0 0.0
    %876 = vmatpush1.xpose.msra.mxu0 0.0
    %877 = vmatprep.subr.mxu0 0.0
    %878 = vmatpush1.xpose.msra.mxu0 0.0
    %879 = vmatprep.subr.mxu0 0.0
    %880 = vmatpush1.xpose.msra.mxu0 0.0
    %881 = vmatprep.subr.mxu0 0.0
    %882 = vmatpush1.xpose.msra.mxu0 0.0
    %883 = vmatprep.subr.mxu0 0.0
    %884 = vmatpush1.xpose.msra.mxu0 0.0
    %885 = vmatprep.subr.mxu0 0.0
    %886 = vmatpush1.xpose.msra.mxu0 0.0
    %887 = vmatprep.subr.mxu0 0.0
    %888 = vmatpush1.xpose.msra.mxu0 0.0
    %889 = vmatprep.subr.mxu0 0.0
    %890 = vmatpush1.xpose.msra.mxu0 0.0
    %891 = vmatprep.subr.mxu0 0.0
    %892 = vmatpush1.xpose.msra.mxu0 0.0
    %893 = vmatprep.subr.mxu0 0.0
    %894 = vmatpush1.xpose.msra.mxu0 0.0
    %895 = vmatprep.subr.mxu0 0.0
    %896 = vmatpush1.xpose.msra.mxu0 0.0
    %897 = vmatprep.subr.mxu0 0.0
    %898 = vmatpush1.xpose.msra.mxu0 0.0
    %899 = vmatprep.subr.mxu0 0.0
    %900 = vmatpush1.xpose.msra.mxu0 0.0
    %901 = vmatprep.subr.mxu0 0.0
    %902 = vmatpush1.xpose.msra.mxu0 0.0
    %903 = vmatprep.subr.mxu0 0.0
    %904 = vmatpush1.xpose.msra.mxu0 0.0
    %905 = vmatprep.subr.mxu0 0.0
    %906 = vmatpush1.xpose.msra.mxu0 0.0
    %907 = vmatprep.subr.mxu0 0.0
    %908 = vmatpush1.xpose.msra.mxu0 0.0
    %909 = vmatprep.subr.mxu0 0.0
    %910 = vmatpush1.xpose.msra.mxu0 0.0
    %911 = vmatprep.subr.mxu0 0.0
    %912 = vmatpush1.xpose.msra.mxu0 0.0
    %913 = vmatprep.subr.mxu0 0.0
    %914 = vmatpush1.xpose.msra.mxu0 0.0
    %915 = vmatprep.mubr.f32.mxu0 0.0
    %916 = vmatmul.mubr.f32.gmra.mrb[0].mxu0 %v843
    %v917 = vpop.f32.mrb[0].mxu0
    %v918 = vadd.f32 0.0, %v917
    %v919 = vpop.f32.mrb[0].mxu0
    %920 = vmatprep.mubr.f32.mxu0 0.0
    %921 = vmatmul.mubr.f32.gmra.mrb[0].mxu0 %v845
    %v922 = vpop.f32.mrb[0].mxu0
    %v923 = vadd.f32 0.0, %v922
    %v924 = vpop.f32.mrb[0].mxu0
    %925 = vdwg.mxu0
    %v926 = vsel %vm342, %v918, %v344
    %v927 = vsel %vm343, %v923, %v345
    %v928 = vmul.f32 %v926, 0.17677669
    %v929 = vmul.f32 %v927, 0.17677669
    %v930 = vsel %vm716, %v928, -inf
    %931 = vmax.xlane.f32.xlu0 %v930
    %v932 = vpop.xlane.xlu0 %931
    %v933 = vsel %vm716, %v929, -inf
    %934 = vmax.xlane.f32.xlu0 %v933
    %v935 = vpop.xlane.xlu0 %934
    %v936 = vsub.f32 %v928, %v932
    %v937 = vsub.f32 %v929, %v935
    %v938 = vmul.f32 %v936, 1.442695
    %v939 = vpow.pop %v938
    %v940 = vmul.f32 %v937, 1.442695
    %v941 = vpow.pop %v940
    %v942 = vsel %vm716, %v939, 0.0
    %943 = vadd.xlane.f32.xlu0 %v942
    %v944 = vpop.xlane.xlu0 %943
    %v945 = vsel %vm716, %v941, 0.0
    %946 = vadd.xlane.f32.xlu0 %v945
    %v947 = vpop.xlane.xlu0 %946
    %v948 = vrcp.pop %v944
    %v949 = vrcp.pop %v947
    %v950 = vmul.f32 %v939, %v948
    %v951 = vmul.f32 %v941, %v949
    %952 = vrot.lane.b32.xlu0 %v622, 120
    %v953 = vpop.permute.xlu0 %952
    %954 = vrot.lane.b32.xlu0 %v623, 120
    %v955 = vpop.permute.xlu0 %954
    %v958 = vsel %vm747, %v953, %v622
    %v959 = vsel %vm747, %v955, %v623
    %v960 = vsel %vm333, %v958, 0.0
    %v961 = vsel %vm334, %v959, 0.0
    %v962 = vadd.f32 %v950, %v960
    %v963 = vadd.f32 %v951, %v961
    %966 = vrot.lane.b32.xlu0 %v121, 96
    %v967 = vpop.permute.xlu0 %966
    %968 = vrot.lane.b32.xlu0 %v126, 96
    %v969 = vpop.permute.xlu0 %968
    %v973 = vsel %vm716, %v962, 0
    %v976 = vsel %vm716, %v963, 0
    %978 = vmatprep.subr.mxu0 0.0
    %979 = vmatpush1.msra.mxu0 %v967
    %980 = vmatprep.subr.mxu0 0.0
    %981 = vmatpush1.msra.mxu0 %v969
    %982 = vmatprep.subr.mxu0 0.0
    %983 = vmatpush1.msra.mxu0 0.0
    %984 = vmatprep.subr.mxu0 0.0
    %985 = vmatpush1.msra.mxu0 0.0
    %986 = vmatprep.subr.mxu0 0.0
    %987 = vmatpush1.msra.mxu0 0.0
    %988 = vmatprep.subr.mxu0 0.0
    %989 = vmatpush1.msra.mxu0 0.0
    %990 = vmatprep.subr.mxu0 0.0
    %991 = vmatpush1.msra.mxu0 0.0
    %992 = vmatprep.subr.mxu0 0.0
    %993 = vmatpush1.msra.mxu0 0.0
    %994 = vmatprep.subr.mxu0 0.0
    %995 = vmatpush1.msra.mxu0 0.0
    %996 = vmatprep.subr.mxu0 0.0
    %997 = vmatpush1.msra.mxu0 0.0
    %998 = vmatprep.subr.mxu0 0.0
    %999 = vmatpush1.msra.mxu0 0.0
    %1000 = vmatprep.subr.mxu0 0.0
    %1001 = vmatpush1.msra.mxu0 0.0
    %1002 = vmatprep.subr.mxu0 0.0
    %1003 = vmatpush1.msra.mxu0 0.0
    %1004 = vmatprep.subr.mxu0 0.0
    %1005 = vmatpush1.msra.mxu0 0.0
    %1006 = vmatprep.subr.mxu0 0.0
    %1007 = vmatpush1.msra.mxu0 0.0
    %1008 = vmatprep.subr.mxu0 0.0
    %1009 = vmatpush1.msra.mxu0 0.0
    %1010 = vmatprep.subr.mxu0 0.0
    %1011 = vmatpush1.msra.mxu0 0.0
    %1012 = vmatprep.subr.mxu0 0.0
    %1013 = vmatpush1.msra.mxu0 0.0
    %1014 = vmatprep.subr.mxu0 0.0
    %1015 = vmatpush1.msra.mxu0 0.0
    %1016 = vmatprep.subr.mxu0 0.0
    %1017 = vmatpush1.msra.mxu0 0.0
    %1018 = vmatprep.subr.mxu0 0.0
    %1019 = vmatpush1.msra.mxu0 0.0
    %1020 = vmatprep.subr.mxu0 0.0
    %1021 = vmatpush1.msra.mxu0 0.0
    %1022 = vmatprep.subr.mxu0 0.0
    %1023 = vmatpush1.msra.mxu0 0.0
    %1024 = vmatprep.subr.mxu0 0.0
    %1025 = vmatpush1.msra.mxu0 0.0
    %1026 = vmatprep.subr.mxu0 0.0
    %1027 = vmatpush1.msra.mxu0 0.0
    %1028 = vmatprep.subr.mxu0 0.0
    %1029 = vmatpush1.msra.mxu0 0.0
    %1030 = vmatprep.subr.mxu0 0.0
    %1031 = vmatpush1.msra.mxu0 0.0
    %1032 = vmatprep.subr.mxu0 0.0
    %1033 = vmatpush1.msra.mxu0 0.0
    %1034 = vmatprep.subr.mxu0 0.0
    %1035 = vmatpush1.msra.mxu0 0.0
    %1036 = vmatprep.subr.mxu0 0.0
    %1037 = vmatpush1.msra.mxu0 0.0
    %1038 = vmatprep.subr.mxu0 0.0
    %1039 = vmatpush1.msra.mxu0 0.0
    %1040 = vmatprep.subr.mxu0 0.0
    %1041 = vmatpush1.msra.mxu0 0.0
    %1042 = vmatprep.mubr.f32.mxu0 0.0
    %1043 = vmatmul.mubr.f32.gmra.mrb[0].mxu0 %v973
    %v1044 = vpop.f32.mrb[0].mxu0
    %v1045 = vadd.f32 0.0, %v1044
    %v1046 = vpop.f32.mrb[0].mxu0
    %1047 = vmatprep.mubr.f32.mxu0 0.0
    %1048 = vmatmul.mubr.f32.gmra.mrb[0].mxu0 %v976
    %v1049 = vpop.f32.mrb[0].mxu0
    %v1050 = vadd.f32 0.0, %v1049
    %v1051 = vpop.f32.mrb[0].mxu0
    %1052 = vdwg.mxu0
    %1053 = vrot.lane.b32.xlu0 %v315, 64
    %v1054 = vpop.permute.xlu0 %1053
    %1055 = vrot.lane.b32.xlu0 %v320, 64
    %v1056 = vpop.permute.xlu0 %1055
    %1057 = vrot.lane.b32.xlu0 %v218, 64
    %v1058 = vpop.permute.xlu0 %1057
    %1059 = vrot.lane.b32.xlu0 %v223, 64
    %v1060 = vpop.permute.xlu0 %1059
    %v1061 = vsel %vm624, %v1054, 0
    %v1063 = vsel %vm624, %v1056, 0
    %v1065 = vsel %vm624, %v1058, 0
    %v1067 = vsel %vm624, %v1060, 0
    %1069 = vmatprep.subr.mxu0 0.0
    %1070 = vmatpush1.xpose.msra.mxu0 %v1065
    %1071 = vmatprep.subr.mxu0 0.0
    %1072 = vmatpush1.xpose.msra.mxu0 %v1067
    %1073 = vmatprep.subr.mxu0 0.0
    %1074 = vmatpush1.xpose.msra.mxu0 0.0
    %1075 = vmatprep.subr.mxu0 0.0
    %1076 = vmatpush1.xpose.msra.mxu0 0.0
    %1077 = vmatprep.subr.mxu0 0.0
    %1078 = vmatpush1.xpose.msra.mxu0 0.0
    %1079 = vmatprep.subr.mxu0 0.0
    %1080 = vmatpush1.xpose.msra.mxu0 0.0
    %1081 = vmatprep.subr.mxu0 0.0
    %1082 = vmatpush1.xpose.msra.mxu0 0.0
    %1083 = vmatprep.subr.mxu0 0.0
    %1084 = vmatpush1.xpose.msra.mxu0 0.0
    %1085 = vmatprep.subr.mxu0 0.0
    %1086 = vmatpush1.xpose.msra.mxu0 0.0
    %1087 = vmatprep.subr.mxu0 0.0
    %1088 = vmatpush1.xpose.msra.mxu0 0.0
    %1089 = vmatprep.subr.mxu0 0.0
    %1090 = vmatpush1.xpose.msra.mxu0 0.0
    %1091 = vmatprep.subr.mxu0 0.0
    %1092 = vmatpush1.xpose.msra.mxu0 0.0
    %1093 = vmatprep.subr.mxu0 0.0
    %1094 = vmatpush1.xpose.msra.mxu0 0.0
    %1095 = vmatprep.subr.mxu0 0.0
    %1096 = vmatpush1.xpose.msra.mxu0 0.0
    %1097 = vmatprep.subr.mxu0 0.0
    %1098 = vmatpush1.xpose.msra.mxu0 0.0
    %1099 = vmatprep.subr.mxu0 0.0
    %1100 = vmatpush1.xpose.msra.mxu0 0.0
    %1101 = vmatprep.subr.mxu0 0.0
    %1102 = vmatpush1.xpose.msra.mxu0 0.0
    %1103 = vmatprep.subr.mxu0 0.0
    %1104 = vmatpush1.xpose.msra.mxu0 0.0
    %1105 = vmatprep.subr.mxu0 0.0
    %1106 = vmatpush1.xpose.msra.mxu0 0.0
    %1107 = vmatprep.subr.mxu0 0.0
    %1108 = vmatpush1.xpose.msra.mxu0 0.0
    %1109 = vmatprep.subr.mxu0 0.0
    %1110 = vmatpush1.xpose.msra.mxu0 0.0
    %1111 = vmatprep.subr.mxu0 0.0
    %1112 = vmatpush1.xpose.msra.mxu0 0.0
    %1113 = vmatprep.subr.mxu0 0.0
    %1114 = vmatpush1.xpose.msra.mxu0 0.0
    %1115 = vmatprep.subr.mxu0 0.0
    %1116 = vmatpush1.xpose.msra.mxu0 0.0
    %1117 = vmatprep.subr.mxu0 0.0
    %1118 = vmatpush1.xpose.msra.mxu0 0.0
    %1119 = vmatprep.subr.mxu0 0.0
    %1120 = vmatpush1.xpose.msra.mxu0 0.0
    %1121 = vmatprep.subr.mxu0 0.0
    %1122 = vmatpush1.xpose.msra.mxu0 0.0
    %1123 = vmatprep.subr.mxu0 0.0
    %1124 = vmatpush1.xpose.msra.mxu0 0.0
    %1125 = vmatprep.subr.mxu0 0.0
    %1126 = vmatpush1.xpose.msra.mxu0 0.0
    %1127 = vmatprep.subr.mxu0 0.0
    %1128 = vmatpush1.xpose.msra.mxu0 0.0
    %1129 = vmatprep.subr.mxu0 0.0
    %1130 = vmatpush1.xpose.msra.mxu0 0.0
    %1131 = vmatprep.subr.mxu0 0.0
    %1132 = vmatpush1.xpose.msra.mxu0 0.0
    %1133 = vmatprep.mubr.f32.mxu0 0.0
    %1134 = vmatmul.mubr.f32.gmra.mrb[0].mxu0 %v1061
    %v1135 = vpop.f32.mrb[0].mxu0
    %v1136 = vadd.f32 0.0, %v1135
    %v1137 = vpop.f32.mrb[0].mxu0
    %1138 = vmatprep.mubr.f32.mxu0 0.0
    %1139 = vmatmul.mubr.f32.gmra.mrb[0].mxu0 %v1063
    %v1140 = vpop.f32.mrb[0].mxu0
    %v1141 = vadd.f32 0.0, %v1140
    %v1142 = vpop.f32.mrb[0].mxu0
    %1143 = vdwg.mxu0
    %v1144 = vsel %vm342, %v1136, %v344
    %v1145 = vsel %vm343, %v1141, %v345
    %v1146 = vmul.f32 %v1144, 0.17677669
    %v1147 = vmul.f32 %v1145, 0.17677669
    %v1148 = vsel %vm716, %v1146, -inf
    %1149 = vmax.xlane.f32.xlu0 %v1148
    %v1150 = vpop.xlane.xlu0 %1149
    %v1151 = vsel %vm716, %v1147, -inf
    %1152 = vmax.xlane.f32.xlu0 %v1151
    %v1153 = vpop.xlane.xlu0 %1152
    %v1154 = vsub.f32 %v1146, %v1150
    %v1155 = vsub.f32 %v1147, %v1153
    %v1156 = vmul.f32 %v1154, 1.442695
    %v1157 = vpow.pop %v1156
    %v1158 = vmul.f32 %v1155, 1.442695
    %v1159 = vpow.pop %v1158
    %v1160 = vsel %vm716, %v1157, 0.0
    %1161 = vadd.xlane.f32.xlu0 %v1160
    %v1162 = vpop.xlane.xlu0 %1161
    %v1163 = vsel %vm716, %v1159, 0.0
    %1164 = vadd.xlane.f32.xlu0 %v1163
    %v1165 = vpop.xlane.xlu0 %1164
    %v1166 = vrcp.pop %v1162
    %v1167 = vrcp.pop %v1165
    %v1168 = vmul.f32 %v1157, %v1166
    %v1169 = vmul.f32 %v1159, %v1167
    %1170 = vrot.lane.b32.xlu0 %v622, 112
    %v1171 = vpop.permute.xlu0 %1170
    %1172 = vrot.lane.b32.xlu0 %v623, 112
    %v1173 = vpop.permute.xlu0 %1172
    %v1176 = vsel %vm747, %v1171, %v953
    %v1177 = vsel %vm747, %v1173, %v955
    %v1178 = vsel %vm333, %v1176, 0.0
    %v1179 = vsel %vm334, %v1177, 0.0
    %v1180 = vadd.f32 %v1168, %v1178
    %v1181 = vadd.f32 %v1169, %v1179
    %1182 = vrot.lane.b32.xlu0 %v121, 64
    %v1183 = vpop.permute.xlu0 %1182
    %1184 = vrot.lane.b32.xlu0 %v126, 64
    %v1185 = vpop.permute.xlu0 %1184
    %v1189 = vsel %vm716, %v1180, 0
    %v1192 = vsel %vm716, %v1181, 0
    %1194 = vmatprep.subr.mxu0 0.0
    %1195 = vmatpush1.msra.mxu0 %v1183
    %1196 = vmatprep.subr.mxu0 0.0
    %1197 = vmatpush1.msra.mxu0 %v1185
    %1198 = vmatprep.subr.mxu0 0.0
    %1199 = vmatpush1.msra.mxu0 0.0
    %1200 = vmatprep.subr.mxu0 0.0
    %1201 = vmatpush1.msra.mxu0 0.0
    %1202 = vmatprep.subr.mxu0 0.0
    %1203 = vmatpush1.msra.mxu0 0.0
    %1204 = vmatprep.subr.mxu0 0.0
    %1205 = vmatpush1.msra.mxu0 0.0
    %1206 = vmatprep.subr.mxu0 0.0
    %1207 = vmatpush1.msra.mxu0 0.0
    %1208 = vmatprep.subr.mxu0 0.0
    %1209 = vmatpush1.msra.mxu0 0.0
    %1210 = vmatprep.subr.mxu0 0.0
    %1211 = vmatpush1.msra.mxu0 0.0
    %1212 = vmatprep.subr.mxu0 0.0
    %1213 = vmatpush1.msra.mxu0 0.0
    %1214 = vmatprep.subr.mxu0 0.0
    %1215 = vmatpush1.msra.mxu0 0.0
    %1216 = vmatprep.subr.mxu0 0.0
    %1217 = vmatpush1.msra.mxu0 0.0
    %1218 = vmatprep.subr.mxu0 0.0
    %1219 = vmatpush1.msra.mxu0 0.0
    %1220 = vmatprep.subr.mxu0 0.0
    %1221 = vmatpush1.msra.mxu0 0.0
    %1222 = vmatprep.subr.mxu0 0.0
    %1223 = vmatpush1.msra.mxu0 0.0
    %1224 = vmatprep.subr.mxu0 0.0
    %1225 = vmatpush1.msra.mxu0 0.0
    %1226 = vmatprep.subr.mxu0 0.0
    %1227 = vmatpush1.msra.mxu0 0.0
    %1228 = vmatprep.subr.mxu0 0.0
    %1229 = vmatpush1.msra.mxu0 0.0
    %1230 = vmatprep.subr.mxu0 0.0
    %1231 = vmatpush1.msra.mxu0 0.0
    %1232 = vmatprep.subr.mxu0 0.0
    %1233 = vmatpush1.msra.mxu0 0.0
    %1234 = vmatprep.subr.mxu0 0.0
    %1235 = vmatpush1.msra.mxu0 0.0
    %1236 = vmatprep.subr.mxu0 0.0
    %1237 = vmatpush1.msra.mxu0 0.0
    %1238 = vmatprep.subr.mxu0 0.0
    %1239 = vmatpush1.msra.mxu0 0.0
    %1240 = vmatprep.subr.mxu0 0.0
    %1241 = vmatpush1.msra.mxu0 0.0
    %1242 = vmatprep.subr.mxu0 0.0
    %1243 = vmatpush1.msra.mxu0 0.0
    %1244 = vmatprep.subr.mxu0 0.0
    %1245 = vmatpush1.msra.mxu0 0.0
    %1246 = vmatprep.subr.mxu0 0.0
    %1247 = vmatpush1.msra.mxu0 0.0
    %1248 = vmatprep.subr.mxu0 0.0
    %1249 = vmatpush1.msra.mxu0 0.0
    %1250 = vmatprep.subr.mxu0 0.0
    %1251 = vmatpush1.msra.mxu0 0.0
    %1252 = vmatprep.subr.mxu0 0.0
    %1253 = vmatpush1.msra.mxu0 0.0
    %1254 = vmatprep.subr.mxu0 0.0
    %1255 = vmatpush1.msra.mxu0 0.0
    %1256 = vmatprep.subr.mxu0 0.0
    %1257 = vmatpush1.msra.mxu0 0.0
    %1258 = vmatprep.mubr.f32.mxu0 0.0
    %1259 = vmatmul.mubr.f32.gmra.mrb[0].mxu0 %v1189
    %v1260 = vpop.f32.mrb[0].mxu0
    %v1261 = vadd.f32 0.0, %v1260
    %v1262 = vpop.f32.mrb[0].mxu0
    %1263 = vmatprep.mubr.f32.mxu0 0.0
    %1264 = vmatmul.mubr.f32.gmra.mrb[0].mxu0 %v1192
    %v1265 = vpop.f32.mrb[0].mxu0
    %v1266 = vadd.f32 0.0, %v1265
    %v1267 = vpop.f32.mrb[0].mxu0
    %1268 = vdwg.mxu0
    %1269 = vrot.lane.b32.xlu0 %v315, 32
    %v1270 = vpop.permute.xlu0 %1269
    %1271 = vrot.lane.b32.xlu0 %v320, 32
    %v1272 = vpop.permute.xlu0 %1271
    %1273 = vrot.lane.b32.xlu0 %v218, 32
    %v1274 = vpop.permute.xlu0 %1273
    %1275 = vrot.lane.b32.xlu0 %v223, 32
    %v1276 = vpop.permute.xlu0 %1275
    %v1277 = vsel %vm624, %v1270, 0
    %v1279 = vsel %vm624, %v1272, 0
    %v1281 = vsel %vm624, %v1274, 0
    %v1283 = vsel %vm624, %v1276, 0
    %1285 = vmatprep.subr.mxu0 0.0
    %1286 = vmatpush1.xpose.msra.mxu0 %v1281
    %1287 = vmatprep.subr.mxu0 0.0
    %1288 = vmatpush1.xpose.msra.mxu0 %v1283
    %1289 = vmatprep.subr.mxu0 0.0
    %1290 = vmatpush1.xpose.msra.mxu0 0.0
    %1291 = vmatprep.subr.mxu0 0.0
    %1292 = vmatpush1.xpose.msra.mxu0 0.0
    %1293 = vmatprep.subr.mxu0 0.0
    %1294 = vmatpush1.xpose.msra.mxu0 0.0
    %1295 = vmatprep.subr.mxu0 0.0
    %1296 = vmatpush1.xpose.msra.mxu0 0.0
    %1297 = vmatprep.subr.mxu0 0.0
    %1298 = vmatpush1.xpose.msra.mxu0 0.0
    %1299 = vmatprep.subr.mxu0 0.0
    %1300 = vmatpush1.xpose.msra.mxu0 0.0
    %1301 = vmatprep.subr.mxu0 0.0
    %1302 = vmatpush1.xpose.msra.mxu0 0.0
    %1303 = vmatprep.subr.mxu0 0.0
    %1304 = vmatpush1.xpose.msra.mxu0 0.0
    %1305 = vmatprep.subr.mxu0 0.0
    %1306 = vmatpush1.xpose.msra.mxu0 0.0
    %1307 = vmatprep.subr.mxu0 0.0
    %1308 = vmatpush1.xpose.msra.mxu0 0.0
    %1309 = vmatprep.subr.mxu0 0.0
    %1310 = vmatpush1.xpose.msra.mxu0 0.0
    %1311 = vmatprep.subr.mxu0 0.0
    %1312 = vmatpush1.xpose.msra.mxu0 0.0
    %1313 = vmatprep.subr.mxu0 0.0
    %1314 = vmatpush1.xpose.msra.mxu0 0.0
    %1315 = vmatprep.subr.mxu0 0.0
    %1316 = vmatpush1.xpose.msra.mxu0 0.0
    %1317 = vmatprep.subr.mxu0 0.0
    %1318 = vmatpush1.xpose.msra.mxu0 0.0
    %1319 = vmatprep.subr.mxu0 0.0
    %1320 = vmatpush1.xpose.msra.mxu0 0.0
    %1321 = vmatprep.subr.mxu0 0.0
    %1322 = vmatpush1.xpose.msra.mxu0 0.0
    %1323 = vmatprep.subr.mxu0 0.0
    %1324 = vmatpush1.xpose.msra.mxu0 0.0
    %1325 = vmatprep.subr.mxu0 0.0
    %1326 = vmatpush1.xpose.msra.mxu0 0.0
    %1327 = vmatprep.subr.mxu0 0.0
    %1328 = vmatpush1.xpose.msra.mxu0 0.0
    %1329 = vmatprep.subr.mxu0 0.0
    %1330 = vmatpush1.xpose.msra.mxu0 0.0
    %1331 = vmatprep.subr.mxu0 0.0
    %1332 = vmatpush1.xpose.msra.mxu0 0.0
    %1333 = vmatprep.subr.mxu0 0.0
    %1334 = vmatpush1.xpose.msra.mxu0 0.0
    %1335 = vmatprep.subr.mxu0 0.0
    %1336 = vmatpush1.xpose.msra.mxu0 0.0
    %1337 = vmatprep.subr.mxu0 0.0
    %1338 = vmatpush1.xpose.msra.mxu0 0.0
    %1339 = vmatprep.subr.mxu0 0.0
    %1340 = vmatpush1.xpose.msra.mxu0 0.0
    %1341 = vmatprep.subr.mxu0 0.0
    %1342 = vmatpush1.xpose.msra.mxu0 0.0
    %1343 = vmatprep.subr.mxu0 0.0
    %1344 = vmatpush1.xpose.msra.mxu0 0.0
    %1345 = vmatprep.subr.mxu0 0.0
    %1346 = vmatpush1.xpose.msra.mxu0 0.0
    %1347 = vmatprep.subr.mxu0 0.0
    %1348 = vmatpush1.xpose.msra.mxu0 0.0
    %1349 = vmatprep.mubr.f32.mxu0 0.0
    %1350 = vmatmul.mubr.f32.gmra.mrb[0].mxu0 %v1277
    %v1351 = vpop.f32.mrb[0].mxu0
    %v1352 = vadd.f32 0.0, %v1351
    %v1353 = vpop.f32.mrb[0].mxu0
    %1354 = vmatprep.mubr.f32.mxu0 0.0
    %1355 = vmatmul.mubr.f32.gmra.mrb[0].mxu0 %v1279
    %v1356 = vpop.f32.mrb[0].mxu0
    %v1357 = vadd.f32 0.0, %v1356
    %v1358 = vpop.f32.mrb[0].mxu0
    %1359 = vdwg.mxu0
    %v1360 = vsel %vm342, %v1352, %v344
    %v1361 = vsel %vm343, %v1357, %v345
    %v1362 = vmul.f32 %v1360, 0.17677669
    %v1363 = vmul.f32 %v1361, 0.17677669
    %v1364 = vsel %vm716, %v1362, -inf
    %1365 = vmax.xlane.f32.xlu0 %v1364
    %v1366 = vpop.xlane.xlu0 %1365
    %v1367 = vsel %vm716, %v1363, -inf
    %1368 = vmax.xlane.f32.xlu0 %v1367
    %v1369 = vpop.xlane.xlu0 %1368
    %v1370 = vsub.f32 %v1362, %v1366
    %v1371 = vsub.f32 %v1363, %v1369
    %v1372 = vmul.f32 %v1370, 1.442695
    %v1373 = vpow.pop %v1372
    %v1374 = vmul.f32 %v1371, 1.442695
    %v1375 = vpow.pop %v1374
    %v1376 = vsel %vm716, %v1373, 0.0
    %1377 = vadd.xlane.f32.xlu0 %v1376
    %v1378 = vpop.xlane.xlu0 %1377
    %v1379 = vsel %vm716, %v1375, 0.0
    %1380 = vadd.xlane.f32.xlu0 %v1379
    %v1381 = vpop.xlane.xlu0 %1380
    %v1382 = vrcp.pop %v1378
    %v1383 = vrcp.pop %v1381
    %v1384 = vmul.f32 %v1373, %v1382
    %v1385 = vmul.f32 %v1375, %v1383
    %1386 = vrot.lane.b32.xlu0 %v622, 104
    %v1387 = vpop.permute.xlu0 %1386
    %1388 = vrot.lane.b32.xlu0 %v623, 104
    %v1389 = vpop.permute.xlu0 %1388
    %v1392 = vsel %vm747, %v1387, %v1171
    %v1393 = vsel %vm747, %v1389, %v1173
    %v1394 = vsel %vm333, %v1392, 0.0
    %v1395 = vsel %vm334, %v1393, 0.0
    %v1396 = vadd.f32 %v1384, %v1394
    %v1397 = vadd.f32 %v1385, %v1395
    %1398 = vrot.lane.b32.xlu0 %v121, 32
    %v1399 = vpop.permute.xlu0 %1398
    %1400 = vrot.lane.b32.xlu0 %v126, 32
    %v1401 = vpop.permute.xlu0 %1400
    %v1405 = vsel %vm716, %v1396, 0
    %v1408 = vsel %vm716, %v1397, 0
    %1410 = vmatprep.subr.mxu0 0.0
    %1411 = vmatpush1.msra.mxu0 %v1399
    %1412 = vmatprep.subr.mxu0 0.0
    %1413 = vmatpush1.msra.mxu0 %v1401
    %1414 = vmatprep.subr.mxu0 0.0
    %1415 = vmatpush1.msra.mxu0 0.0
    %1416 = vmatprep.subr.mxu0 0.0
    %1417 = vmatpush1.msra.mxu0 0.0
    %1418 = vmatprep.subr.mxu0 0.0
    %1419 = vmatpush1.msra.mxu0 0.0
    %1420 = vmatprep.subr.mxu0 0.0
    %1421 = vmatpush1.msra.mxu0 0.0
    %1422 = vmatprep.subr.mxu0 0.0
    %1423 = vmatpush1.msra.mxu0 0.0
    %1424 = vmatprep.subr.mxu0 0.0
    %1425 = vmatpush1.msra.mxu0 0.0
    %1426 = vmatprep.subr.mxu0 0.0
    %1427 = vmatpush1.msra.mxu0 0.0
    %1428 = vmatprep.subr.mxu0 0.0
    %1429 = vmatpush1.msra.mxu0 0.0
    %1430 = vmatprep.subr.mxu0 0.0
    %1431 = vmatpush1.msra.mxu0 0.0
    %1432 = vmatprep.subr.mxu0 0.0
    %1433 = vmatpush1.msra.mxu0 0.0
    %1434 = vmatprep.subr.mxu0 0.0
    %1435 = vmatpush1.msra.mxu0 0.0
    %1436 = vmatprep.subr.mxu0 0.0
    %1437 = vmatpush1.msra.mxu0 0.0
    %1438 = vmatprep.subr.mxu0 0.0
    %1439 = vmatpush1.msra.mxu0 0.0
    %1440 = vmatprep.subr.mxu0 0.0
    %1441 = vmatpush1.msra.mxu0 0.0
    %1442 = vmatprep.subr.mxu0 0.0
    %1443 = vmatpush1.msra.mxu0 0.0
    %1444 = vmatprep.subr.mxu0 0.0
    %1445 = vmatpush1.msra.mxu0 0.0
    %1446 = vmatprep.subr.mxu0 0.0
    %1447 = vmatpush1.msra.mxu0 0.0
    %1448 = vmatprep.subr.mxu0 0.0
    %1449 = vmatpush1.msra.mxu0 0.0
    %1450 = vmatprep.subr.mxu0 0.0
    %1451 = vmatpush1.msra.mxu0 0.0
    %1452 = vmatprep.subr.mxu0 0.0
    %1453 = vmatpush1.msra.mxu0 0.0
    %1454 = vmatprep.subr.mxu0 0.0
    %1455 = vmatpush1.msra.mxu0 0.0
    %1456 = vmatprep.subr.mxu0 0.0
    %1457 = vmatpush1.msra.mxu0 0.0
    %1458 = vmatprep.subr.mxu0 0.0
    %1459 = vmatpush1.msra.mxu0 0.0
    %1460 = vmatprep.subr.mxu0 0.0
    %1461 = vmatpush1.msra.mxu0 0.0
    %1462 = vmatprep.subr.mxu0 0.0
    %1463 = vmatpush1.msra.mxu0 0.0
    %1464 = vmatprep.subr.mxu0 0.0
    %1465 = vmatpush1.msra.mxu0 0.0
    %1466 = vmatprep.subr.mxu0 0.0
    %1467 = vmatpush1.msra.mxu0 0.0
    %1468 = vmatprep.subr.mxu0 0.0
    %1469 = vmatpush1.msra.mxu0 0.0
    %1470 = vmatprep.subr.mxu0 0.0
    %1471 = vmatpush1.msra.mxu0 0.0
    %1472 = vmatprep.subr.mxu0 0.0
    %1473 = vmatpush1.msra.mxu0 0.0
    %1474 = vmatprep.mubr.f32.mxu0 0.0
    %1475 = vmatmul.mubr.f32.gmra.mrb[0].mxu0 %v1405
    %v1476 = vpop.f32.mrb[0].mxu0
    %v1477 = vadd.f32 0.0, %v1476
    %v1478 = vpop.f32.mrb[0].mxu0
    %1479 = vmatprep.mubr.f32.mxu0 0.0
    %1480 = vmatmul.mubr.f32.gmra.mrb[0].mxu0 %v1408
    %v1481 = vpop.f32.mrb[0].mxu0
    %v1482 = vadd.f32 0.0, %v1481
    %v1483 = vpop.f32.mrb[0].mxu0
    %1484 = vdwg.mxu0
    %1487 = vrot.lane.b32.xlu0 %v1045, 32
    %v1488 = vpop.permute.xlu0 %1487
    %1489 = vrot.lane.b32.xlu0 %v1050, 32
    %v1490 = vpop.permute.xlu0 %1489
    %1495 = vrot.lane.b32.xlu0 %v1261, 64
    %v1496 = vpop.permute.xlu0 %1495
    %1497 = vrot.lane.b32.xlu0 %v1266, 64
    %v1498 = vpop.permute.xlu0 %1497
    %1503 = vrot.lane.b32.xlu0 %v1477, 96
    %v1504 = vpop.permute.xlu0 %1503
    %1505 = vrot.lane.b32.xlu0 %v1482, 96
    %v1506 = vpop.permute.xlu0 %1505
    %v1509 = vsel %vm624, %v827, %v1488
    %v1510 = vsel %vm624, %v832, %v1490
    %vm1511 = vcmask 523264
    %v1512 = vsel %vm1511, %v1509, %v1496
    %v1513 = vsel %vm1511, %v1510, %v1498
    %vm1514 = vcmask 785408
    %v1515 = vsel %vm1514, %v1512, %v1504
    %v1516 = vsel %vm1514, %v1513, %v1506
    %v1517 = vld [vmem:[#allocation2 + $0x180] sm:$0xff]
    %v1518 = vld [vmem:[#allocation2 + $0x188] sm:$0xff]
    %v1519 = vld [vmem:[#allocation2 + $0x190] sm:$0xff]
    %v1520 = vld [vmem:[#allocation2 + $0x198] sm:$0xff]
    %v1521 = vld [vmem:[#allocation2 + $0x1a0] sm:$0xff]
    %v1522 = vld [vmem:[#allocation2 + $0x1a8] sm:$0xff]
    %v1523 = vld [vmem:[#allocation2 + $0x1b0] sm:$0xff]
    %v1524 = vld [vmem:[#allocation2 + $0x1b8] sm:$0xff]
    %v1525 = vld [vmem:[#allocation2 + $0x1c0] sm:$0xff]
    %v1526 = vld [vmem:[#allocation2 + $0x1c8] sm:$0xff]
    %v1527 = vld [vmem:[#allocation2 + $0x1d0] sm:$0xff]
    %v1528 = vld [vmem:[#allocation2 + $0x1d8] sm:$0xff]
    %v1529 = vld [vmem:[#allocation2 + $0x1e0] sm:$0xff]
    %v1530 = vld [vmem:[#allocation2 + $0x1e8] sm:$0xff]
    %v1531 = vld [vmem:[#allocation2 + $0x1f0] sm:$0xff]
    %v1532 = vld [vmem:[#allocation2 + $0x1f8] sm:$0xff]
    %v1533 = vlaneseq
    %v1534 = vshrl.u32 %v1533, 7
    %v1535 = vsub.s32 3, %v1534
    %v1536 = vrot.slane %v31, %v1535
    %1537 = vmatprep.subr.mxu0 0.0
    %1538 = vmatpush1.msra.mxu0 %v1517
    %1539 = vmatprep.subr.mxu0 0.0
    %1540 = vmatpush1.msra.mxu0 %v1518
    %1541 = vmatprep.subr.mxu0 0.0
    %1542 = vmatpush1.msra.mxu0 %v1519
    %1543 = vmatprep.subr.mxu0 0.0
    %1544 = vmatpush1.msra.mxu0 %v1520
    %1545 = vmatprep.subr.mxu0 0.0
    %1546 = vmatpush1.msra.mxu0 %v1521
    %1547 = vmatprep.subr.mxu0 0.0
    %1548 = vmatpush1.msra.mxu0 %v1522
    %1549 = vmatprep.subr.mxu0 0.0
    %1550 = vmatpush1.msra.mxu0 %v1523
    %1551 = vmatprep.subr.mxu0 0.0
    %1552 = vmatpush1.msra.mxu0 %v1524
    %1553 = vmatprep.subr.mxu0 0.0
    %1554 = vmatpush1.msra.mxu0 %v1525
    %1555 = vmatprep.subr.mxu0 0.0
    %1556 = vmatpush1.msra.mxu0 %v1526
    %1557 = vmatprep.subr.mxu0 0.0
    %1558 = vmatpush1.msra.mxu0 %v1527
    %1559 = vmatprep.subr.mxu0 0.0
    %1560 = vmatpush1.msra.mxu0 %v1528
    %1561 = vmatprep.subr.mxu0 0.0
    %1562 = vmatpush1.msra.mxu0 %v1529
    %1563 = vmatprep.subr.mxu0 0.0
    %1564 = vmatpush1.msra.mxu0 %v1530
    %1565 = vmatprep.subr.mxu0 0.0
    %1566 = vmatpush1.msra.mxu0 %v1531
    %1567 = vmatprep.subr.mxu0 0.0
    %1568 = vmatpush1.msra.mxu0 %v1532
    %1569 = vmatprep.subr.mxu0 0.0
    %1570 = vmatpush1.msra.mxu0 0.0
    %1571 = vmatprep.subr.mxu0 0.0
    %1572 = vmatpush1.msra.mxu0 0.0
    %1573 = vmatprep.subr.mxu0 0.0
    %1574 = vmatpush1.msra.mxu0 0.0
    %1575 = vmatprep.subr.mxu0 0.0
    %1576 = vmatpush1.msra.mxu0 0.0
    %1577 = vmatprep.subr.mxu0 0.0
    %1578 = vmatpush1.msra.mxu0 0.0
    %1579 = vmatprep.subr.mxu0 0.0
    %1580 = vmatpush1.msra.mxu0 0.0
    %1581 = vmatprep.subr.mxu0 0.0
    %1582 = vmatpush1.msra.mxu0 0.0
    %1583 = vmatprep.subr.mxu0 0.0
    %1584 = vmatpush1.msra.mxu0 0.0
    %1585 = vmatprep.subr.mxu0 0.0
    %1586 = vmatpush1.msra.mxu0 0.0
    %1587 = vmatprep.subr.mxu0 0.0
    %1588 = vmatpush1.msra.mxu0 0.0
    %1589 = vmatprep.subr.mxu0 0.0
    %1590 = vmatpush1.msra.mxu0 0.0
    %1591 = vmatprep.subr.mxu0 0.0
    %1592 = vmatpush1.msra.mxu0 0.0
    %1593 = vmatprep.subr.mxu0 0.0
    %1594 = vmatpush1.msra.mxu0 0.0
    %1595 = vmatprep.subr.mxu0 0.0
    %1596 = vmatpush1.msra.mxu0 0.0
    %1597 = vmatprep.subr.mxu0 0.0
    %1598 = vmatpush1.msra.mxu0 0.0
    %1599 = vmatprep.subr.mxu0 0.0
    %1600 = vmatpush1.msra.mxu0 0.0
    %1601 = vmatprep.mubr.f32.mxu0 0.0
    %1602 = vmatmul.mubr.f32.gmra.mrb[0].mxu0 %v1515
    %v1603 = vpop.f32.mrb[0].mxu0
    %v1604 = vadd.f32 %v1536, %v1603
    %v1605 = vpop.f32.mrb[0].mxu0
    %1606 = vmatprep.mubr.f32.mxu0 0.0
    %1607 = vmatmul.mubr.f32.gmra.mrb[0].mxu0 %v1516
    %v1608 = vpop.f32.mrb[0].mxu0
    %v1609 = vadd.f32 %v1536, %v1608
    %v1610 = vpop.f32.mrb[0].mxu0
    %1611 = vdwg.mxu0
    %1612 = vst [vmem:[%s4] sm:$0xff] %v1604
    %1613 = vst [vmem:[%s4 + $0x8] sm:$0xff] %v1609
    // Predicated region
    $region22: #{cross_attention.1} parent=1 // pred_check
      _
    $region23: #{cross_attention.1} parent=1 // pred_check_branch
      %1615 = sbr.rel (0) target = $region25
    $region24: #{cross_attention.1} parent=1 // pred_region
      _
    $region25: #{cross_attention.1} parent=1 // pred_fallthru
      _
    // Predicated region
    $region26: #{cross_attention.1} parent=1 // pred_check
      _
    $region27: #{cross_attention.1} parent=1 // pred_check_branch
      %1617 = sbr.rel (0) target = $region29
    $region28: #{cross_attention.1} parent=1 // pred_region
      _
    $region29: #{cross_attention.1} parent=1 // pred_fallthru
      _
    %1618 = vsyncpa [#allocation3], 1

</llo_original>
